<compile_context>
chip_gen: v7x
topology: tpu7x:2x2x1
jax: 0.10.0
libtpu: 0.0.40
codegen_flags: <defaults>
</compile_context>

<pallas_src>
import jax
import jax.numpy as jnp
import numpy as np
from jax import lax
from jax.experimental import pallas as pl
from jax.experimental.pallas import tpu as pltpu

LANE = 128


def _round_up(n, m):
    return (n + m - 1) // m * m


def lstm_fc_kernel(x_ref, wih_ref, whh_ref, b_ref, wfc_ref, bfc_ref, out_ref):
    """One batch block: full-sequence LSTM recurrence + fused final Linear.

    x_ref  : (T, Bt, D)   time-major input block
    wih_ref: (D, 4*Hp)    input->gates weight (transposed, gate-padded)
    whh_ref: (Hp, 4*Hp)   hidden->gates weight (transposed, padded)
    b_ref  : (1, 4*Hp)    fused b_ih + b_hh (gate-padded)
    wfc_ref: (Hp, Op)     final linear weight (transposed, padded)
    bfc_ref: (1, Op)      final linear bias (padded)
    out_ref: (Bt, Op)     logits (padded lanes; wrapper slices [:, :O])
    """
    T, Bt, D = x_ref.shape
    Hp = whh_ref.shape[0]

    # Input projection for ALL timesteps: one big MXU matmul, off the serial
    # critical path.  Kept flat (T*Bt, 4Hp) so each timestep's slab is a
    # contiguous, statically-indexed, lane-dense block of rows.
    x_flat = x_ref[...].reshape(T * Bt, D)
    xg = jnp.dot(x_flat, wih_ref[...],
                 preferred_element_type=jnp.float32) + b_ref[...]

    whh = whh_ref[...]   # VMEM/vreg-resident across the whole recurrence
    # TODO(synk): hold W_hh inside the MXU across the unrolled loop via
    # pltpu.matmul_push_rhs / matmul_acc_lhs / matmul_pop (needs per-gate
    # column tiling of the (Hp, 4Hp) RHS: <=128 cols/push on v5e, <=256 on
    # v6e/v7x); kept on jnp.dot for portability.
    # TODO(synk): for realistic H/B, cast h and the weights to bf16 for the
    # dots (f32 accumulation); kept f32 here for exact parity with the ref.

    h = jnp.zeros((Bt, Hp), jnp.float32)
    c = jnp.zeros((Bt, Hp), jnp.float32)

    # Statically unrolled time loop (T small & static): every slice below is a
    # compile-time-constant, lane-tile-aligned window.
    for t in range(T):
        gates = xg[t * Bt:(t + 1) * Bt, :] + jnp.dot(
            h, whh, preferred_element_type=jnp.float32)
        # PyTorch gate order: i, f, g, o (each slice is a whole 128-lane tile)
        i_g = jax.nn.sigmoid(gates[:, 0 * Hp:1 * Hp])
        f_g = jax.nn.sigmoid(gates[:, 1 * Hp:2 * Hp])
        g_g = jnp.tanh(gates[:, 2 * Hp:3 * Hp])
        o_g = jax.nn.sigmoid(gates[:, 3 * Hp:4 * Hp])
        c = f_g * c + i_g * g_g
        h = o_g * jnp.tanh(c)

    # Fused final Linear on the last hidden state; lane-dense (Op) store.
    out_ref[...] = jnp.dot(h, wfc_ref[...],
                           preferred_element_type=jnp.float32) + bfc_ref[...]


def sentiment_rnn_forward(x, params, *, block_b=128):
    """x: (B, T, D) float32 -> (B, output_dim) float32 logits."""
    B, T, D = x.shape
    w_ih_t = params["w_ih_t"]    # (D, 4Hp)
    w_hh_t = params["w_hh_t"]    # (Hp, 4Hp)
    b = params["b"]              # (1, 4Hp)
    w_fc_t = params["w_fc_t"]    # (Hp, Op)
    b_fc = params["b_fc"]        # (1, Op)
    out_dim = params["output_dim"]
    Hp, G = w_hh_t.shape
    Op = w_fc_t.shape[1]

    # Batch tiling: one grid axis over batch blocks so the activation DMA for
    # block i+1 overlaps block i's serial recurrence.  At the toy batch size
    # this is a single block; Bt must be a multiple of 8 (or the full batch).
    if B <= block_b:
        bt = B
    else:
        assert B % block_b == 0, "pad the batch to a multiple of block_b"
        bt = block_b
    grid = (B // bt,)

    # Time-major so each timestep is a contiguous (bt, D) slab.  This cheap
    # transpose of x replaces the old HBM-materialized xg projection entirely.
    x_tm = jnp.transpose(x, (1, 0, 2))   # (T, B, D)

    out_padded = pl.pallas_call(
        lstm_fc_kernel,
        out_shape=jax.ShapeDtypeStruct((B, Op), jnp.float32),
        grid_spec=pltpu.PrefetchScalarGridSpec(
            num_scalar_prefetch=0,
            grid=grid,
            in_specs=[
                pl.BlockSpec((T, bt, D), lambda i: (0, i, 0)),   # activations
                pl.BlockSpec((D, G), lambda i: (0, 0)),          # W_ih^T
                pl.BlockSpec((Hp, G), lambda i: (0, 0)),         # W_hh^T
                pl.BlockSpec((1, G), lambda i: (0, 0)),          # b_ih + b_hh
                pl.BlockSpec((Hp, Op), lambda i: (0, 0)),        # W_fc^T
                pl.BlockSpec((1, Op), lambda i: (0, 0)),         # b_fc
            ],
            out_specs=pl.BlockSpec((bt, Op), lambda i: (i, 0)),
        ),
        compiler_params=pltpu.CompilerParams(
            # Batch blocks are independent: shard across TensorCores on v7x;
            # harmless (plain loop) on v5e/v6e.
            dimension_semantics=("parallel",),
        ),
    )(x_tm, w_ih_t, w_hh_t, b, w_fc_t, b_fc)

    return out_padded[:, :out_dim]


def init_params(key, input_dim, hidden_dim, output_dim):
    """PyTorch-initialised LSTM + Linear parameters (transposed layouts)."""
    ks = jax.random.split(key, 6)
    s = 1.0 / np.sqrt(hidden_dim)
    # PyTorch stores W_ih: (4H, D), W_hh: (4H, H), fc.weight: (O, H).
    w_ih = jax.random.uniform(ks[0], (4 * hidden_dim, input_dim),
                              jnp.float32, -s, s)
    w_hh = jax.random.uniform(ks[1], (4 * hidden_dim, hidden_dim),
                              jnp.float32, -s, s)
    b_ih = jax.random.uniform(ks[2], (4 * hidden_dim,), jnp.float32, -s, s)
    b_hh = jax.random.uniform(ks[3], (4 * hidden_dim,), jnp.float32, -s, s)
    w_fc = jax.random.uniform(ks[4], (output_dim, hidden_dim),
                              jnp.float32, -s, s)
    b_fc = jax.random.uniform(ks[5], (output_dim,), jnp.float32, -s, s)
    return {
        "w_ih_t": w_ih.T,                         # (D, 4H)
        "w_hh_t": w_hh.T,                         # (H, 4H)
        "b": (b_ih + b_hh)[None, :],              # (1, 4H)
        "w_fc_t": w_fc.T,                         # (H, O)
        "b_fc": b_fc[None, :],                    # (1, O)
        "hidden_dim": hidden_dim,
        "output_dim": output_dim,
    }


def pad_params_for_kernel(params):
    """Zero-pad gate columns / hidden rows to whole 128-lane tiles.

    Padding is a mathematical no-op: padded gate columns get zero weights and
    zero bias, padded hidden rows of W_hh / W_fc are zero, so padded h/c lanes
    never influence the real ones and padded FC lanes are sliced away.  The
    i/f/g/o column order is preserved by padding each gate block separately.
    """
    H = params["hidden_dim"]
    O = params["output_dim"]
    Hp = _round_up(H, LANE)
    Op = _round_up(O, LANE)

    def pad_gate_cols(w):                       # (X, 4H) -> (X, 4Hp)
        X = w.shape[0]
        w4 = w.reshape(X, 4, H)
        w4 = jnp.pad(w4, ((0, 0), (0, 0), (0, Hp - H)))
        return w4.reshape(X, 4 * Hp)

    w_ih_t = pad_gate_cols(params["w_ih_t"])                        # (D, 4Hp)
    w_hh_t = pad_gate_cols(params["w_hh_t"])                        # (H, 4Hp)
    w_hh_t = jnp.pad(w_hh_t, ((0, Hp - H), (0, 0)))                 # (Hp, 4Hp)
    b = pad_gate_cols(params["b"])                                  # (1, 4Hp)
    w_fc_t = jnp.pad(params["w_fc_t"], ((0, Hp - H), (0, Op - O)))  # (Hp, Op)
    b_fc = jnp.pad(params["b_fc"], ((0, 0), (0, Op - O)))           # (1, Op)

    return {"w_ih_t": w_ih_t, "w_hh_t": w_hh_t, "b": b,
            "w_fc_t": w_fc_t, "b_fc": b_fc,
            "hidden_dim": H, "output_dim": O}


def reference_forward(x, params):
    """Pure-JAX reference mirroring torch.nn.LSTM(batch_first=True) + Linear."""
    B, T, D = x.shape
    H = params["hidden_dim"]
    h0 = jnp.zeros((B, H), jnp.float32)
    c0 = jnp.zeros((B, H), jnp.float32)

    def step(carry, x_t):
        h, c = carry
        gates = x_t @ params["w_ih_t"] + h @ params["w_hh_t"] + params["b"]
        i_g = jax.nn.sigmoid(gates[:, 0:H])
        f_g = jax.nn.sigmoid(gates[:, H:2 * H])
        g_g = jnp.tanh(gates[:, 2 * H:3 * H])
        o_g = jax.nn.sigmoid(gates[:, 3 * H:4 * H])
        c_n = f_g * c + i_g * g_g
        h_n = o_g * jnp.tanh(c_n)
        return (h_n, c_n), None

    (h_T, _), _ = lax.scan(step, (h0, c0), jnp.transpose(x, (1, 0, 2)))
    return h_T @ params["w_fc_t"] + params["b_fc"]


if __name__ == "__main__":
    # Small shapes consistent with SentimentRNN.forward: x is (B, T, input_dim);
    # hidden_dim=128 is the module default (and keeps gate slices lane-aligned).
    B, T = 2, 8
    input_dim, hidden_dim, output_dim = 64, 128, 2

    key = jax.random.PRNGKey(0)
    k_x, k_p = jax.random.split(key)
    x = jax.random.normal(k_x, (B, T, input_dim), jnp.float32)

    params = init_params(k_p, input_dim, hidden_dim, output_dim)
    kparams = pad_params_for_kernel(params)

    out = sentiment_rnn_forward(x, kparams)
    out = jax.block_until_ready(out)

    ref = reference_forward(x, params)
    np.testing.assert_allclose(np.asarray(out), np.asarray(ref),
                               rtol=1e-4, atol=1e-4)
    print("KERNEL_OK")
</pallas_src>

<mosaic_0001>
module attributes {stable_mosaic.version = 11 : i64} {
  func.func @lstm_fc_kernel(%arg0: i32, %arg1: memref<8x2x64xf32, #tpu.memory_space<vmem>>, %arg2: memref<64x512xf32, #tpu.memory_space<vmem>>, %arg3: memref<128x512xf32, #tpu.memory_space<vmem>>, %arg4: memref<1x512xf32, #tpu.memory_space<vmem>>, %arg5: memref<128x128xf32, #tpu.memory_space<vmem>>, %arg6: memref<1x128xf32, #tpu.memory_space<vmem>>, %arg7: memref<2x128xf32, #tpu.memory_space<vmem>>) attributes {dimension_semantics = [#tpu.dimension_semantics<parallel>], iteration_bounds = array<i64: 1>, scalar_prefetch = 0 : i64, scratch_operands = 0 : i64, tpu.core_type = #tpu.core_type<tc>, window_params = [{transform_indices = @transform_0, window_bounds = array<i64: 8, 2, 64>}, {pipeline_mode = #tpu.pipeline_mode<synchronous>, transform_indices = @transform_1, window_bounds = array<i64: 64, 512>}, {pipeline_mode = #tpu.pipeline_mode<synchronous>, transform_indices = @transform_2, window_bounds = array<i64: 128, 512>}, {pipeline_mode = #tpu.pipeline_mode<synchronous>, transform_indices = @transform_3, window_bounds = array<i64: 1, 512>}, {pipeline_mode = #tpu.pipeline_mode<synchronous>, transform_indices = @transform_4, window_bounds = array<i64: 128, 128>}, {pipeline_mode = #tpu.pipeline_mode<synchronous>, transform_indices = @transform_5, window_bounds = array<i64: 1, 128>}, {transform_indices = @transform_6, window_bounds = array<i64: 2, 128>}]} {
    %c0 = arith.constant 0 : index
    %c0_0 = arith.constant 0 : index
    %c0_1 = arith.constant 0 : index
    %0 = vector.load %arg1[%c0, %c0_0, %c0_1] : memref<8x2x64xf32, #tpu.memory_space<vmem>>, vector<8x2x64xf32>
    %1 = vector.shape_cast %0 : vector<8x2x64xf32> to vector<16x64xf32>
    %c0_2 = arith.constant 0 : index
    %c0_3 = arith.constant 0 : index
    %2 = vector.load %arg2[%c0_2, %c0_3] : memref<64x512xf32, #tpu.memory_space<vmem>>, vector<64x512xf32>
    %cst = arith.constant dense<0.000000e+00> : vector<16x512xf32>
    %3 = tpu.matmul %1, %2, %cst {dimension_numbers = #tpu.dot_dimension_numbers<[1], [0], [0], [1], [0, 0, 1, 1], [], []>} : vector<16x64xf32>, vector<64x512xf32>, vector<16x512xf32> -> vector<16x512xf32>
    %c0_4 = arith.constant 0 : index
    %c0_5 = arith.constant 0 : index
    %4 = vector.load %arg4[%c0_4, %c0_5] : memref<1x512xf32, #tpu.memory_space<vmem>>, vector<1x512xf32>
    %5 = vector.broadcast %4 : vector<1x512xf32> to vector<16x512xf32>
    %6 = arith.addf %3, %5 : vector<16x512xf32>
    %c0_6 = arith.constant 0 : index
    %c0_7 = arith.constant 0 : index
    %7 = vector.load %arg3[%c0_6, %c0_7] : memref<128x512xf32, #tpu.memory_space<vmem>>, vector<128x512xf32>
    %cst_8 = arith.constant 0.000000e+00 : f32
    %8 = vector.broadcast %cst_8 : f32 to vector<2x128xf32>
    %cst_9 = arith.constant 0.000000e+00 : f32
    %9 = vector.broadcast %cst_9 : f32 to vector<2x128xf32>
    %10 = vector.extract_strided_slice %6 {offsets = [0, 0], sizes = [2, 512], strides = [1, 1]} : vector<16x512xf32> to vector<2x512xf32>
    %cst_10 = arith.constant dense<0.000000e+00> : vector<2x512xf32>
    %11 = tpu.matmul %8, %7, %cst_10 {dimension_numbers = #tpu.dot_dimension_numbers<[1], [0], [0], [1], [0, 0, 1, 1], [], []>} : vector<2x128xf32>, vector<128x512xf32>, vector<2x512xf32> -> vector<2x512xf32>
    %12 = arith.addf %10, %11 : vector<2x512xf32>
    %13 = vector.extract_strided_slice %12 {offsets = [0, 0], sizes = [2, 128], strides = [1, 1]} : vector<2x512xf32> to vector<2x128xf32>
    %14 = arith.negf %13 : vector<2x128xf32>
    %15 = math.exp %14 : vector<2x128xf32>
    %cst_11 = arith.constant 1.000000e+00 : f32
    %16 = vector.broadcast %cst_11 : f32 to vector<2x128xf32>
    %17 = arith.addf %16, %15 : vector<2x128xf32>
    %18 = arith.divf %16, %17 : vector<2x128xf32>
    %19 = vector.extract_strided_slice %12 {offsets = [0, 128], sizes = [2, 128], strides = [1, 1]} : vector<2x512xf32> to vector<2x128xf32>
    %20 = arith.negf %19 : vector<2x128xf32>
    %21 = math.exp %20 : vector<2x128xf32>
    %cst_12 = arith.constant 1.000000e+00 : f32
    %22 = vector.broadcast %cst_12 : f32 to vector<2x128xf32>
    %23 = arith.addf %22, %21 : vector<2x128xf32>
    %24 = arith.divf %22, %23 : vector<2x128xf32>
    %25 = vector.extract_strided_slice %12 {offsets = [0, 256], sizes = [2, 128], strides = [1, 1]} : vector<2x512xf32> to vector<2x128xf32>
    %26 = math.tanh %25 : vector<2x128xf32>
    %27 = vector.extract_strided_slice %12 {offsets = [0, 384], sizes = [2, 128], strides = [1, 1]} : vector<2x512xf32> to vector<2x128xf32>
    %28 = arith.negf %27 : vector<2x128xf32>
    %29 = math.exp %28 : vector<2x128xf32>
    %cst_13 = arith.constant 1.000000e+00 : f32
    %30 = vector.broadcast %cst_13 : f32 to vector<2x128xf32>
    %31 = arith.addf %30, %29 : vector<2x128xf32>
    %32 = arith.divf %30, %31 : vector<2x128xf32>
    %33 = arith.mulf %24, %9 : vector<2x128xf32>
    %34 = arith.mulf %18, %26 : vector<2x128xf32>
    %35 = arith.addf %33, %34 : vector<2x128xf32>
    %36 = math.tanh %35 : vector<2x128xf32>
    %37 = arith.mulf %32, %36 : vector<2x128xf32>
    %38 = vector.extract_strided_slice %6 {offsets = [2, 0], sizes = [2, 512], strides = [1, 1]} : vector<16x512xf32> to vector<2x512xf32>
    %cst_14 = arith.constant dense<0.000000e+00> : vector<2x512xf32>
    %39 = tpu.matmul %37, %7, %cst_14 {dimension_numbers = #tpu.dot_dimension_numbers<[1], [0], [0], [1], [0, 0, 1, 1], [], []>} : vector<2x128xf32>, vector<128x512xf32>, vector<2x512xf32> -> vector<2x512xf32>
    %40 = arith.addf %38, %39 : vector<2x512xf32>
    %41 = vector.extract_strided_slice %40 {offsets = [0, 0], sizes = [2, 128], strides = [1, 1]} : vector<2x512xf32> to vector<2x128xf32>
    %42 = arith.negf %41 : vector<2x128xf32>
    %43 = math.exp %42 : vector<2x128xf32>
    %cst_15 = arith.constant 1.000000e+00 : f32
    %44 = vector.broadcast %cst_15 : f32 to vector<2x128xf32>
    %45 = arith.addf %44, %43 : vector<2x128xf32>
    %46 = arith.divf %44, %45 : vector<2x128xf32>
    %47 = vector.extract_strided_slice %40 {offsets = [0, 128], sizes = [2, 128], strides = [1, 1]} : vector<2x512xf32> to vector<2x128xf32>
    %48 = arith.negf %47 : vector<2x128xf32>
    %49 = math.exp %48 : vector<2x128xf32>
    %cst_16 = arith.constant 1.000000e+00 : f32
    %50 = vector.broadcast %cst_16 : f32 to vector<2x128xf32>
    %51 = arith.addf %50, %49 : vector<2x128xf32>
    %52 = arith.divf %50, %51 : vector<2x128xf32>
    %53 = vector.extract_strided_slice %40 {offsets = [0, 256], sizes = [2, 128], strides = [1, 1]} : vector<2x512xf32> to vector<2x128xf32>
    %54 = math.tanh %53 : vector<2x128xf32>
    %55 = vector.extract_strided_slice %40 {offsets = [0, 384], sizes = [2, 128], strides = [1, 1]} : vector<2x512xf32> to vector<2x128xf32>
    %56 = arith.negf %55 : vector<2x128xf32>
    %57 = math.exp %56 : vector<2x128xf32>
    %cst_17 = arith.constant 1.000000e+00 : f32
    %58 = vector.broadcast %cst_17 : f32 to vector<2x128xf32>
    %59 = arith.addf %58, %57 : vector<2x128xf32>
    %60 = arith.divf %58, %59 : vector<2x128xf32>
    %61 = arith.mulf %52, %35 : vector<2x128xf32>
    %62 = arith.mulf %46, %54 : vector<2x128xf32>
    %63 = arith.addf %61, %62 : vector<2x128xf32>
    %64 = math.tanh %63 : vector<2x128xf32>
    %65 = arith.mulf %60, %64 : vector<2x128xf32>
    %66 = vector.extract_strided_slice %6 {offsets = [4, 0], sizes = [2, 512], strides = [1, 1]} : vector<16x512xf32> to vector<2x512xf32>
    %cst_18 = arith.constant dense<0.000000e+00> : vector<2x512xf32>
    %67 = tpu.matmul %65, %7, %cst_18 {dimension_numbers = #tpu.dot_dimension_numbers<[1], [0], [0], [1], [0, 0, 1, 1], [], []>} : vector<2x128xf32>, vector<128x512xf32>, vector<2x512xf32> -> vector<2x512xf32>
    %68 = arith.addf %66, %67 : vector<2x512xf32>
    %69 = vector.extract_strided_slice %68 {offsets = [0, 0], sizes = [2, 128], strides = [1, 1]} : vector<2x512xf32> to vector<2x128xf32>
    %70 = arith.negf %69 : vector<2x128xf32>
    %71 = math.exp %70 : vector<2x128xf32>
    %cst_19 = arith.constant 1.000000e+00 : f32
    %72 = vector.broadcast %cst_19 : f32 to vector<2x128xf32>
    %73 = arith.addf %72, %71 : vector<2x128xf32>
    %74 = arith.divf %72, %73 : vector<2x128xf32>
    %75 = vector.extract_strided_slice %68 {offsets = [0, 128], sizes = [2, 128], strides = [1, 1]} : vector<2x512xf32> to vector<2x128xf32>
    %76 = arith.negf %75 : vector<2x128xf32>
    %77 = math.exp %76 : vector<2x128xf32>
    %cst_20 = arith.constant 1.000000e+00 : f32
    %78 = vector.broadcast %cst_20 : f32 to vector<2x128xf32>
    %79 = arith.addf %78, %77 : vector<2x128xf32>
    %80 = arith.divf %78, %79 : vector<2x128xf32>
    %81 = vector.extract_strided_slice %68 {offsets = [0, 256], sizes = [2, 128], strides = [1, 1]} : vector<2x512xf32> to vector<2x128xf32>
    %82 = math.tanh %81 : vector<2x128xf32>
    %83 = vector.extract_strided_slice %68 {offsets = [0, 384], sizes = [2, 128], strides = [1, 1]} : vector<2x512xf32> to vector<2x128xf32>
    %84 = arith.negf %83 : vector<2x128xf32>
    %85 = math.exp %84 : vector<2x128xf32>
    %cst_21 = arith.constant 1.000000e+00 : f32
    %86 = vector.broadcast %cst_21 : f32 to vector<2x128xf32>
    %87 = arith.addf %86, %85 : vector<2x128xf32>
    %88 = arith.divf %86, %87 : vector<2x128xf32>
    %89 = arith.mulf %80, %63 : vector<2x128xf32>
    %90 = arith.mulf %74, %82 : vector<2x128xf32>
    %91 = arith.addf %89, %90 : vector<2x128xf32>
    %92 = math.tanh %91 : vector<2x128xf32>
    %93 = arith.mulf %88, %92 : vector<2x128xf32>
    %94 = vector.extract_strided_slice %6 {offsets = [6, 0], sizes = [2, 512], strides = [1, 1]} : vector<16x512xf32> to vector<2x512xf32>
    %cst_22 = arith.constant dense<0.000000e+00> : vector<2x512xf32>
    %95 = tpu.matmul %93, %7, %cst_22 {dimension_numbers = #tpu.dot_dimension_numbers<[1], [0], [0], [1], [0, 0, 1, 1], [], []>} : vector<2x128xf32>, vector<128x512xf32>, vector<2x512xf32> -> vector<2x512xf32>
    %96 = arith.addf %94, %95 : vector<2x512xf32>
    %97 = vector.extract_strided_slice %96 {offsets = [0, 0], sizes = [2, 128], strides = [1, 1]} : vector<2x512xf32> to vector<2x128xf32>
    %98 = arith.negf %97 : vector<2x128xf32>
    %99 = math.exp %98 : vector<2x128xf32>
    %cst_23 = arith.constant 1.000000e+00 : f32
    %100 = vector.broadcast %cst_23 : f32 to vector<2x128xf32>
    %101 = arith.addf %100, %99 : vector<2x128xf32>
    %102 = arith.divf %100, %101 : vector<2x128xf32>
    %103 = vector.extract_strided_slice %96 {offsets = [0, 128], sizes = [2, 128], strides = [1, 1]} : vector<2x512xf32> to vector<2x128xf32>
    %104 = arith.negf %103 : vector<2x128xf32>
    %105 = math.exp %104 : vector<2x128xf32>
    %cst_24 = arith.constant 1.000000e+00 : f32
    %106 = vector.broadcast %cst_24 : f32 to vector<2x128xf32>
    %107 = arith.addf %106, %105 : vector<2x128xf32>
    %108 = arith.divf %106, %107 : vector<2x128xf32>
    %109 = vector.extract_strided_slice %96 {offsets = [0, 256], sizes = [2, 128], strides = [1, 1]} : vector<2x512xf32> to vector<2x128xf32>
    %110 = math.tanh %109 : vector<2x128xf32>
    %111 = vector.extract_strided_slice %96 {offsets = [0, 384], sizes = [2, 128], strides = [1, 1]} : vector<2x512xf32> to vector<2x128xf32>
    %112 = arith.negf %111 : vector<2x128xf32>
    %113 = math.exp %112 : vector<2x128xf32>
    %cst_25 = arith.constant 1.000000e+00 : f32
    %114 = vector.broadcast %cst_25 : f32 to vector<2x128xf32>
    %115 = arith.addf %114, %113 : vector<2x128xf32>
    %116 = arith.divf %114, %115 : vector<2x128xf32>
    %117 = arith.mulf %108, %91 : vector<2x128xf32>
    %118 = arith.mulf %102, %110 : vector<2x128xf32>
    %119 = arith.addf %117, %118 : vector<2x128xf32>
    %120 = math.tanh %119 : vector<2x128xf32>
    %121 = arith.mulf %116, %120 : vector<2x128xf32>
    %122 = vector.extract_strided_slice %6 {offsets = [8, 0], sizes = [2, 512], strides = [1, 1]} : vector<16x512xf32> to vector<2x512xf32>
    %cst_26 = arith.constant dense<0.000000e+00> : vector<2x512xf32>
    %123 = tpu.matmul %121, %7, %cst_26 {dimension_numbers = #tpu.dot_dimension_numbers<[1], [0], [0], [1], [0, 0, 1, 1], [], []>} : vector<2x128xf32>, vector<128x512xf32>, vector<2x512xf32> -> vector<2x512xf32>
    %124 = arith.addf %122, %123 : vector<2x512xf32>
    %125 = vector.extract_strided_slice %124 {offsets = [0, 0], sizes = [2, 128], strides = [1, 1]} : vector<2x512xf32> to vector<2x128xf32>
    %126 = arith.negf %125 : vector<2x128xf32>
    %127 = math.exp %126 : vector<2x128xf32>
    %cst_27 = arith.constant 1.000000e+00 : f32
    %128 = vector.broadcast %cst_27 : f32 to vector<2x128xf32>
    %129 = arith.addf %128, %127 : vector<2x128xf32>
    %130 = arith.divf %128, %129 : vector<2x128xf32>
    %131 = vector.extract_strided_slice %124 {offsets = [0, 128], sizes = [2, 128], strides = [1, 1]} : vector<2x512xf32> to vector<2x128xf32>
    %132 = arith.negf %131 : vector<2x128xf32>
    %133 = math.exp %132 : vector<2x128xf32>
    %cst_28 = arith.constant 1.000000e+00 : f32
    %134 = vector.broadcast %cst_28 : f32 to vector<2x128xf32>
    %135 = arith.addf %134, %133 : vector<2x128xf32>
    %136 = arith.divf %134, %135 : vector<2x128xf32>
    %137 = vector.extract_strided_slice %124 {offsets = [0, 256], sizes = [2, 128], strides = [1, 1]} : vector<2x512xf32> to vector<2x128xf32>
    %138 = math.tanh %137 : vector<2x128xf32>
    %139 = vector.extract_strided_slice %124 {offsets = [0, 384], sizes = [2, 128], strides = [1, 1]} : vector<2x512xf32> to vector<2x128xf32>
    %140 = arith.negf %139 : vector<2x128xf32>
    %141 = math.exp %140 : vector<2x128xf32>
    %cst_29 = arith.constant 1.000000e+00 : f32
    %142 = vector.broadcast %cst_29 : f32 to vector<2x128xf32>
    %143 = arith.addf %142, %141 : vector<2x128xf32>
    %144 = arith.divf %142, %143 : vector<2x128xf32>
    %145 = arith.mulf %136, %119 : vector<2x128xf32>
    %146 = arith.mulf %130, %138 : vector<2x128xf32>
    %147 = arith.addf %145, %146 : vector<2x128xf32>
    %148 = math.tanh %147 : vector<2x128xf32>
    %149 = arith.mulf %144, %148 : vector<2x128xf32>
    %150 = vector.extract_strided_slice %6 {offsets = [10, 0], sizes = [2, 512], strides = [1, 1]} : vector<16x512xf32> to vector<2x512xf32>
    %cst_30 = arith.constant dense<0.000000e+00> : vector<2x512xf32>
    %151 = tpu.matmul %149, %7, %cst_30 {dimension_numbers = #tpu.dot_dimension_numbers<[1], [0], [0], [1], [0, 0, 1, 1], [], []>} : vector<2x128xf32>, vector<128x512xf32>, vector<2x512xf32> -> vector<2x512xf32>
    %152 = arith.addf %150, %151 : vector<2x512xf32>
    %153 = vector.extract_strided_slice %152 {offsets = [0, 0], sizes = [2, 128], strides = [1, 1]} : vector<2x512xf32> to vector<2x128xf32>
    %154 = arith.negf %153 : vector<2x128xf32>
    %155 = math.exp %154 : vector<2x128xf32>
    %cst_31 = arith.constant 1.000000e+00 : f32
    %156 = vector.broadcast %cst_31 : f32 to vector<2x128xf32>
    %157 = arith.addf %156, %155 : vector<2x128xf32>
    %158 = arith.divf %156, %157 : vector<2x128xf32>
    %159 = vector.extract_strided_slice %152 {offsets = [0, 128], sizes = [2, 128], strides = [1, 1]} : vector<2x512xf32> to vector<2x128xf32>
    %160 = arith.negf %159 : vector<2x128xf32>
    %161 = math.exp %160 : vector<2x128xf32>
    %cst_32 = arith.constant 1.000000e+00 : f32
    %162 = vector.broadcast %cst_32 : f32 to vector<2x128xf32>
    %163 = arith.addf %162, %161 : vector<2x128xf32>
    %164 = arith.divf %162, %163 : vector<2x128xf32>
    %165 = vector.extract_strided_slice %152 {offsets = [0, 256], sizes = [2, 128], strides = [1, 1]} : vector<2x512xf32> to vector<2x128xf32>
    %166 = math.tanh %165 : vector<2x128xf32>
    %167 = vector.extract_strided_slice %152 {offsets = [0, 384], sizes = [2, 128], strides = [1, 1]} : vector<2x512xf32> to vector<2x128xf32>
    %168 = arith.negf %167 : vector<2x128xf32>
    %169 = math.exp %168 : vector<2x128xf32>
    %cst_33 = arith.constant 1.000000e+00 : f32
    %170 = vector.broadcast %cst_33 : f32 to vector<2x128xf32>
    %171 = arith.addf %170, %169 : vector<2x128xf32>
    %172 = arith.divf %170, %171 : vector<2x128xf32>
    %173 = arith.mulf %164, %147 : vector<2x128xf32>
    %174 = arith.mulf %158, %166 : vector<2x128xf32>
    %175 = arith.addf %173, %174 : vector<2x128xf32>
    %176 = math.tanh %175 : vector<2x128xf32>
    %177 = arith.mulf %172, %176 : vector<2x128xf32>
    %178 = vector.extract_strided_slice %6 {offsets = [12, 0], sizes = [2, 512], strides = [1, 1]} : vector<16x512xf32> to vector<2x512xf32>
    %cst_34 = arith.constant dense<0.000000e+00> : vector<2x512xf32>
    %179 = tpu.matmul %177, %7, %cst_34 {dimension_numbers = #tpu.dot_dimension_numbers<[1], [0], [0], [1], [0, 0, 1, 1], [], []>} : vector<2x128xf32>, vector<128x512xf32>, vector<2x512xf32> -> vector<2x512xf32>
    %180 = arith.addf %178, %179 : vector<2x512xf32>
    %181 = vector.extract_strided_slice %180 {offsets = [0, 0], sizes = [2, 128], strides = [1, 1]} : vector<2x512xf32> to vector<2x128xf32>
    %182 = arith.negf %181 : vector<2x128xf32>
    %183 = math.exp %182 : vector<2x128xf32>
    %cst_35 = arith.constant 1.000000e+00 : f32
    %184 = vector.broadcast %cst_35 : f32 to vector<2x128xf32>
    %185 = arith.addf %184, %183 : vector<2x128xf32>
    %186 = arith.divf %184, %185 : vector<2x128xf32>
    %187 = vector.extract_strided_slice %180 {offsets = [0, 128], sizes = [2, 128], strides = [1, 1]} : vector<2x512xf32> to vector<2x128xf32>
    %188 = arith.negf %187 : vector<2x128xf32>
    %189 = math.exp %188 : vector<2x128xf32>
    %cst_36 = arith.constant 1.000000e+00 : f32
    %190 = vector.broadcast %cst_36 : f32 to vector<2x128xf32>
    %191 = arith.addf %190, %189 : vector<2x128xf32>
    %192 = arith.divf %190, %191 : vector<2x128xf32>
    %193 = vector.extract_strided_slice %180 {offsets = [0, 256], sizes = [2, 128], strides = [1, 1]} : vector<2x512xf32> to vector<2x128xf32>
    %194 = math.tanh %193 : vector<2x128xf32>
    %195 = vector.extract_strided_slice %180 {offsets = [0, 384], sizes = [2, 128], strides = [1, 1]} : vector<2x512xf32> to vector<2x128xf32>
    %196 = arith.negf %195 : vector<2x128xf32>
    %197 = math.exp %196 : vector<2x128xf32>
    %cst_37 = arith.constant 1.000000e+00 : f32
    %198 = vector.broadcast %cst_37 : f32 to vector<2x128xf32>
    %199 = arith.addf %198, %197 : vector<2x128xf32>
    %200 = arith.divf %198, %199 : vector<2x128xf32>
    %201 = arith.mulf %192, %175 : vector<2x128xf32>
    %202 = arith.mulf %186, %194 : vector<2x128xf32>
    %203 = arith.addf %201, %202 : vector<2x128xf32>
    %204 = math.tanh %203 : vector<2x128xf32>
    %205 = arith.mulf %200, %204 : vector<2x128xf32>
    %206 = vector.extract_strided_slice %6 {offsets = [14, 0], sizes = [2, 512], strides = [1, 1]} : vector<16x512xf32> to vector<2x512xf32>
    %cst_38 = arith.constant dense<0.000000e+00> : vector<2x512xf32>
    %207 = tpu.matmul %205, %7, %cst_38 {dimension_numbers = #tpu.dot_dimension_numbers<[1], [0], [0], [1], [0, 0, 1, 1], [], []>} : vector<2x128xf32>, vector<128x512xf32>, vector<2x512xf32> -> vector<2x512xf32>
    %208 = arith.addf %206, %207 : vector<2x512xf32>
    %209 = vector.extract_strided_slice %208 {offsets = [0, 0], sizes = [2, 128], strides = [1, 1]} : vector<2x512xf32> to vector<2x128xf32>
    %210 = arith.negf %209 : vector<2x128xf32>
    %211 = math.exp %210 : vector<2x128xf32>
    %cst_39 = arith.constant 1.000000e+00 : f32
    %212 = vector.broadcast %cst_39 : f32 to vector<2x128xf32>
    %213 = arith.addf %212, %211 : vector<2x128xf32>
    %214 = arith.divf %212, %213 : vector<2x128xf32>
    %215 = vector.extract_strided_slice %208 {offsets = [0, 128], sizes = [2, 128], strides = [1, 1]} : vector<2x512xf32> to vector<2x128xf32>
    %216 = arith.negf %215 : vector<2x128xf32>
    %217 = math.exp %216 : vector<2x128xf32>
    %cst_40 = arith.constant 1.000000e+00 : f32
    %218 = vector.broadcast %cst_40 : f32 to vector<2x128xf32>
    %219 = arith.addf %218, %217 : vector<2x128xf32>
    %220 = arith.divf %218, %219 : vector<2x128xf32>
    %221 = vector.extract_strided_slice %208 {offsets = [0, 256], sizes = [2, 128], strides = [1, 1]} : vector<2x512xf32> to vector<2x128xf32>
    %222 = math.tanh %221 : vector<2x128xf32>
    %223 = vector.extract_strided_slice %208 {offsets = [0, 384], sizes = [2, 128], strides = [1, 1]} : vector<2x512xf32> to vector<2x128xf32>
    %224 = arith.negf %223 : vector<2x128xf32>
    %225 = math.exp %224 : vector<2x128xf32>
    %cst_41 = arith.constant 1.000000e+00 : f32
    %226 = vector.broadcast %cst_41 : f32 to vector<2x128xf32>
    %227 = arith.addf %226, %225 : vector<2x128xf32>
    %228 = arith.divf %226, %227 : vector<2x128xf32>
    %229 = arith.mulf %220, %203 : vector<2x128xf32>
    %230 = arith.mulf %214, %222 : vector<2x128xf32>
    %231 = arith.addf %229, %230 : vector<2x128xf32>
    %232 = math.tanh %231 : vector<2x128xf32>
    %233 = arith.mulf %228, %232 : vector<2x128xf32>
    %c0_42 = arith.constant 0 : index
    %c0_43 = arith.constant 0 : index
    %234 = vector.load %arg5[%c0_42, %c0_43] : memref<128x128xf32, #tpu.memory_space<vmem>>, vector<128x128xf32>
    %cst_44 = arith.constant dense<0.000000e+00> : vector<2x128xf32>
    %235 = tpu.matmul %233, %234, %cst_44 {dimension_numbers = #tpu.dot_dimension_numbers<[1], [0], [0], [1], [0, 0, 1, 1], [], []>} : vector<2x128xf32>, vector<128x128xf32>, vector<2x128xf32> -> vector<2x128xf32>
    %c0_45 = arith.constant 0 : index
    %c0_46 = arith.constant 0 : index
    %236 = vector.load %arg6[%c0_45, %c0_46] : memref<1x128xf32, #tpu.memory_space<vmem>>, vector<1x128xf32>
    %237 = vector.broadcast %236 : vector<1x128xf32> to vector<2x128xf32>
    %238 = arith.addf %235, %237 : vector<2x128xf32>
    %c0_47 = arith.constant 0 : index
    %c0_48 = arith.constant 0 : index
    %239 = vector.load %arg7[%c0_47, %c0_48] : memref<2x128xf32, #tpu.memory_space<vmem>>, vector<2x128xf32>
    tpu.vector_store %arg7[%c0_47, %c0_48], %238 {strides = array<i32>} : memref<2x128xf32, #tpu.memory_space<vmem>>, vector<2x128xf32>,
    return
  }
  func.func @transform_0(%arg0: i32) -> (i32, i32, i32) {
    %c0_i32 = arith.constant 0 : i32
    %c0_i32_0 = arith.constant 0 : i32
    %c0_i32_1 = arith.constant 0 : i32
    return %c0_i32, %arg0, %c0_i32_0 : i32, i32, i32
  }
  func.func @transform_1(%arg0: i32) -> (i32, i32) {
    %c0_i32 = arith.constant 0 : i32
    %c0_i32_0 = arith.constant 0 : i32
    %c0_i32_1 = arith.constant 0 : i32
    return %c0_i32, %c0_i32_0 : i32, i32
  }
  func.func @transform_2(%arg0: i32) -> (i32, i32) {
    %c0_i32 = arith.constant 0 : i32
    %c0_i32_0 = arith.constant 0 : i32
    %c0_i32_1 = arith.constant 0 : i32
    return %c0_i32, %c0_i32_0 : i32, i32
  }
  func.func @transform_3(%arg0: i32) -> (i32, i32) {
    %c0_i32 = arith.constant 0 : i32
    %c0_i32_0 = arith.constant 0 : i32
    %c0_i32_1 = arith.constant 0 : i32
    return %c0_i32, %c0_i32_0 : i32, i32
  }
  func.func @transform_4(%arg0: i32) -> (i32, i32) {
    %c0_i32 = arith.constant 0 : i32
    %c0_i32_0 = arith.constant 0 : i32
    %c0_i32_1 = arith.constant 0 : i32
    return %c0_i32, %c0_i32_0 : i32, i32
  }
  func.func @transform_5(%arg0: i32) -> (i32, i32) {
    %c0_i32 = arith.constant 0 : i32
    %c0_i32_0 = arith.constant 0 : i32
    %c0_i32_1 = arith.constant 0 : i32
    return %c0_i32, %c0_i32_0 : i32, i32
  }
  func.func @transform_6(%arg0: i32) -> (i32, i32) {
    %c0_i32 = arith.constant 0 : i32
    %c0_i32_0 = arith.constant 0 : i32
    return %arg0, %c0_i32 : i32, i32
  }
}

</mosaic_0001>

<llo_original>
// kernel: tpu_custom_call.1
$region0: #{tpu_custom_call.1}
  #allocation0 [shape = 'u32[]', space=smem, size = 0x4, offset = 0x4, fixed_abs, tag = 'smem constant byte address 0x4 - core index']
  #allocation1 [shape = 'u32[144,128]{1,0:T(1,128)}', space=vmem, size = 0x12000, scoped, tag = 'internal scratch']
  %s0 = inlined_call_operand.hbm [shape: f32[8,2,64], index: 0, kind: input, shape index: {}]
  %s1 = inlined_call_operand.hbm [shape: f32[64,512], index: 1, kind: input, shape index: {}]
  %s2 = inlined_call_operand.hbm [shape: f32[128,512], index: 2, kind: input, shape index: {}]
  %s3 = inlined_call_operand.vmem [shape: f32[1,512], index: 3, kind: input, shape index: {}]
  %s4 = inlined_call_operand.hbm [shape: f32[128,128], index: 4, kind: input, shape index: {}]
  %s5 = inlined_call_operand.vmem [shape: f32[1,128], index: 5, kind: input, shape index: {}]
  %s6 = inlined_call_operand.hbm [shape: f32[2,128], index: 6, kind: output, shape index: {}]
  %s7 = sld [smem:[#allocation0]]
  $region50: #{tpu_custom_call.1} parent=0
    _
  %s9 = ssub.s32 1, %s7
  %s10 = scalar_select 0, %s9, %s7
  $region1: #{tpu_custom_call.1} parent=0
    #allocation2 [shape = 'u8[8192]{0}', space=vmem, size = 0x2000, scoped, tag = 'input window, operand 0, single buffered']
    #allocation3 [shape = 's32[1]{0}', space=sflag, size = 0x4, scoped, tag = 'scoped memory for tpu_custom_call.1']
    #allocation4 [shape = 's32[1]{0}', space=sflag, size = 0x4, scoped, tag = 'scoped memory for tpu_custom_call.1']
    #allocation5 [shape = 'u8[131072]{0}', space=vmem, size = 0x20000, scoped, tag = 'input window, operand 1, single buffered']
    #allocation6 [shape = 's32[1]{0}', space=sflag, size = 0x4, scoped, tag = 'scoped memory for tpu_custom_call.1']
    #allocation7 [shape = 'u8[262144]{0}', space=vmem, size = 0x40000, scoped, tag = 'input window, operand 2, single buffered']
    #allocation8 [shape = 'u8[65536]{0}', space=vmem, size = 0x10000, scoped, tag = 'input window, operand 4, single buffered']
    #allocation9 [shape = 's32[1]{0}', space=sflag, size = 0x4, scoped, tag = 'scoped memory for tpu_custom_call.1']
    #allocation10 [shape = 'u8[1024]{0}', space=vmem, size = 0x400, scoped, tag = 'output window, operand 0, single buffered']
    %11 = vsyncpa [#allocation3], 0
    %12 = vsyncpa [#allocation6], 0
    %13 = vsyncpa [#allocation9], 0
    %14 = vsyncpa [#allocation4], 0
    // Predicated region
    $region2: #{tpu_custom_call.1} parent=1 // pred_check
      _
    $region3: #{tpu_custom_call.1} parent=1 // pred_check_branch
      %16 = sbr.rel (0) target = $region5
    $region4: #{tpu_custom_call.1} parent=1 // pred_region
      %s18 = ssub.s32 256, 256
      %19 = vsyncadd [#allocation3], %s18
      %s20 = sshll.u32 [#allocation2], 4
      %s21 = int_to_ptr.vmem [resolvable:$true] %s20
      %26 = dma.hbm_to_vmem [thread:$0]  %s0, 256, %s21, [#allocation3], 32, 32, 2
    $region5: #{tpu_custom_call.1} parent=1 // pred_fallthru
      _
    // Predicated region
    $region6: #{tpu_custom_call.1} parent=1 // pred_check
      _
    $region7: #{tpu_custom_call.1} parent=1 // pred_check_branch
      %28 = sbr.rel (0) target = $region9
    $region8: #{tpu_custom_call.1} parent=1 // pred_region
      %s30 = ssub.s32 4096, 4096
      %31 = vsyncadd [#allocation6], %s30
      %s32 = sshll.u32 [#allocation5], 4
      %s33 = int_to_ptr.vmem [resolvable:$true] %s32
      %38 = dma.hbm_to_vmem [thread:$0]  %s1, 4096, %s33, [#allocation6], 512, 512, 32
    $region9: #{tpu_custom_call.1} parent=1 // pred_fallthru
      _
    // Predicated region
    $region10: #{tpu_custom_call.1} parent=1 // pred_check
      _
    $region11: #{tpu_custom_call.1} parent=1 // pred_check_branch
      %40 = sbr.rel (0) target = $region13
    $region12: #{tpu_custom_call.1} parent=1 // pred_region
      %s42 = ssub.s32 8192, 8192
      %43 = vsyncadd [#allocation6], %s42
      %s44 = sshll.u32 [#allocation7], 4
      %s45 = int_to_ptr.vmem [resolvable:$true] %s44
      %50 = dma.hbm_to_vmem [thread:$0]  %s2, 8192, %s45, [#allocation6], 512, 512, 32
    $region13: #{tpu_custom_call.1} parent=1 // pred_fallthru
      _
    // Predicated region
    $region14: #{tpu_custom_call.1} parent=1 // pred_check
      _
    $region15: #{tpu_custom_call.1} parent=1 // pred_check_branch
      %52 = sbr.rel (0) target = $region17
    $region16: #{tpu_custom_call.1} parent=1 // pred_region
      _
    $region17: #{tpu_custom_call.1} parent=1 // pred_fallthru
      _
    // Predicated region
    $region18: #{tpu_custom_call.1} parent=1 // pred_check
      _
    $region19: #{tpu_custom_call.1} parent=1 // pred_check_branch
      %54 = sbr.rel (0) target = $region21
    $region20: #{tpu_custom_call.1} parent=1 // pred_region
      %s56 = ssub.s32 2048, 2048
      %57 = vsyncadd [#allocation9], %s56
      %s58 = sshll.u32 [#allocation8], 4
      %s59 = int_to_ptr.vmem [resolvable:$true] %s58
      %64 = dma.hbm_to_vmem [thread:$0]  %s4, 2048, %s59, [#allocation9], 128, 128, 8
    $region21: #{tpu_custom_call.1} parent=1 // pred_fallthru
      _
    // Predicated region
    $region22: #{tpu_custom_call.1} parent=1 // pred_check
      _
    $region23: #{tpu_custom_call.1} parent=1 // pred_check_branch
      %66 = sbr.rel (0) target = $region25
    $region24: #{tpu_custom_call.1} parent=1 // pred_region
      _
    $region25: #{tpu_custom_call.1} parent=1 // pred_fallthru
      _
    // Predicated region
    $region26: #{tpu_custom_call.1} parent=1 // pred_check
      _
    $region27: #{tpu_custom_call.1} parent=1 // pred_check_branch
      %68 = sbr.rel (0) target = $region29
    $region28: #{tpu_custom_call.1} parent=1 // pred_region
      %69 = dma.done [#allocation3], 256
    $region29: #{tpu_custom_call.1} parent=1 // pred_fallthru
      _
    // Predicated region
    $region30: #{tpu_custom_call.1} parent=1 // pred_check
      _
    $region31: #{tpu_custom_call.1} parent=1 // pred_check_branch
      %71 = sbr.rel (0) target = $region33
    $region32: #{tpu_custom_call.1} parent=1 // pred_region
      %72 = dma.done [#allocation6], 4096
    $region33: #{tpu_custom_call.1} parent=1 // pred_fallthru
      _
    // Predicated region
    $region34: #{tpu_custom_call.1} parent=1 // pred_check
      _
    $region35: #{tpu_custom_call.1} parent=1 // pred_check_branch
      %74 = sbr.rel (0) target = $region37
    $region36: #{tpu_custom_call.1} parent=1 // pred_region
      %75 = dma.done [#allocation6], 8192
    $region37: #{tpu_custom_call.1} parent=1 // pred_fallthru
      _
    // Predicated region
    $region38: #{tpu_custom_call.1} parent=1 // pred_check
      _
    $region39: #{tpu_custom_call.1} parent=1 // pred_check_branch
      %77 = sbr.rel (0) target = $region41
    $region40: #{tpu_custom_call.1} parent=1 // pred_region
      %78 = dma.done [#allocation9], 2048
    $region41: #{tpu_custom_call.1} parent=1 // pred_fallthru
      _
    %v79 = vld [vmem:[#allocation2] sm:$0x3]
    %v80 = vld [vmem:[#allocation2 + $0x2] sm:$0x3]
    %v81 = vld [vmem:[#allocation2 + $0x4] sm:$0x3]
    %v82 = vld [vmem:[#allocation2 + $0x6] sm:$0x3]
    %v83 = vld [vmem:[#allocation2 + $0x8] sm:$0x3]
    %v84 = vld [vmem:[#allocation2 + $0xa] sm:$0x3]
    %v85 = vld [vmem:[#allocation2 + $0xc] sm:$0x3]
    %v86 = vld [vmem:[#allocation2 + $0xe] sm:$0x3]
    %v87 = vld [vmem:[#allocation5] sm:$0xff]
    %v88 = vld [vmem:[#allocation5 + $0x8] sm:$0xff]
    %v89 = vld [vmem:[#allocation5 + $0x10] sm:$0xff]
    %v90 = vld [vmem:[#allocation5 + $0x18] sm:$0xff]
    %v91 = vld [vmem:[#allocation5 + $0x20] sm:$0xff]
    %v92 = vld [vmem:[#allocation5 + $0x28] sm:$0xff]
    %v93 = vld [vmem:[#allocation5 + $0x30] sm:$0xff]
    %v94 = vld [vmem:[#allocation5 + $0x38] sm:$0xff]
    %v95 = vld [vmem:[#allocation5 + $0x40] sm:$0xff]
    %v96 = vld [vmem:[#allocation5 + $0x48] sm:$0xff]
    %v97 = vld [vmem:[#allocation5 + $0x50] sm:$0xff]
    %v98 = vld [vmem:[#allocation5 + $0x58] sm:$0xff]
    %v99 = vld [vmem:[#allocation5 + $0x60] sm:$0xff]
    %v100 = vld [vmem:[#allocation5 + $0x68] sm:$0xff]
    %v101 = vld [vmem:[#allocation5 + $0x70] sm:$0xff]
    %v102 = vld [vmem:[#allocation5 + $0x78] sm:$0xff]
    %v103 = vld [vmem:[#allocation5 + $0x80] sm:$0xff]
    %v104 = vld [vmem:[#allocation5 + $0x88] sm:$0xff]
    %v105 = vld [vmem:[#allocation5 + $0x90] sm:$0xff]
    %v106 = vld [vmem:[#allocation5 + $0x98] sm:$0xff]
    %v107 = vld [vmem:[#allocation5 + $0xa0] sm:$0xff]
    %v108 = vld [vmem:[#allocation5 + $0xa8] sm:$0xff]
    %v109 = vld [vmem:[#allocation5 + $0xb0] sm:$0xff]
    %v110 = vld [vmem:[#allocation5 + $0xb8] sm:$0xff]
    %v111 = vld [vmem:[#allocation5 + $0xc0] sm:$0xff]
    %v112 = vld [vmem:[#allocation5 + $0xc8] sm:$0xff]
    %v113 = vld [vmem:[#allocation5 + $0xd0] sm:$0xff]
    %v114 = vld [vmem:[#allocation5 + $0xd8] sm:$0xff]
    %v115 = vld [vmem:[#allocation5 + $0xe0] sm:$0xff]
    %v116 = vld [vmem:[#allocation5 + $0xe8] sm:$0xff]
    %v117 = vld [vmem:[#allocation5 + $0xf0] sm:$0xff]
    %v118 = vld [vmem:[#allocation5 + $0xf8] sm:$0xff]
    %v119 = vld [vmem:[%s3] sm:$0xf]
    %v121 = vlaneseq
    %v122 = vshrl.u32 %v121, 7
    %v123 = vsub.s32 0, %v122
    %v124 = vrot.slane %v119, %v123
    %v125 = vlaneseq
    %v126 = vshrl.u32 %v125, 7
    %v127 = vsub.s32 1, %v126
    %v128 = vrot.slane %v119, %v127
    %v129 = vlaneseq
    %v130 = vshrl.u32 %v129, 7
    %v131 = vsub.s32 2, %v130
    %v132 = vrot.slane %v119, %v131
    %v133 = vlaneseq
    %v134 = vshrl.u32 %v133, 7
    %v135 = vsub.s32 3, %v134
    %v136 = vrot.slane %v119, %v135
    %v149 = vcombine.low %v79, %v80
    %v150 = vcombine.low %v81, %v82
    %v152 = vunpack.c.l.s4 1983009808
    %v153 = vunpack.c.0.s8 %v152
    %v154 = vlaneseq
    %v155 = vshrl.u32 %v154, 7
    %v156 = vsub.s32 %v153, %v155
    %v157 = vrot.slane %v149, %v156
    %v159 = vunpack.c.l.s4 1983009808
    %v160 = vunpack.c.0.s8 %v159
    %v161 = vlaneseq
    %v162 = vshrl.u32 %v161, 7
    %v163 = vsub.s32 %v160, %v162
    %v164 = vrot.slane %v150, %v163
    %v165 = vcombine.low %v157, %v164
    %v166 = vcombine.low %v83, %v84
    %v167 = vcombine.low %v85, %v86
    %v169 = vunpack.c.l.s4 1983009808
    %v170 = vunpack.c.0.s8 %v169
    %v171 = vlaneseq
    %v172 = vshrl.u32 %v171, 7
    %v173 = vsub.s32 %v170, %v172
    %v174 = vrot.slane %v166, %v173
    %v176 = vunpack.c.l.s4 1983009808
    %v177 = vunpack.c.0.s8 %v176
    %v178 = vlaneseq
    %v179 = vshrl.u32 %v178, 7
    %v180 = vsub.s32 %v177, %v179
    %v181 = vrot.slane %v167, %v180
    %v182 = vcombine.low %v174, %v181
    %vm183 = vcmask 523264
    %v184 = vsel %vm183, %v165, 0
    %v186 = vsel %vm183, %v182, 0
    %188 = vmatprep.subr.mxu0 %v88
    %189 = vmatpush1.msra.mxu0 %v87
    %190 = vmatprep.subr.mxu0 %v92
    %191 = vmatpush1.msra.mxu0 %v91
    %192 = vmatprep.subr.mxu0 %v96
    %193 = vmatpush1.msra.mxu0 %v95
    %194 = vmatprep.subr.mxu0 %v100
    %195 = vmatpush1.msra.mxu0 %v99
    %196 = vmatprep.subr.mxu0 %v104
    %197 = vmatpush1.msra.mxu0 %v103
    %198 = vmatprep.subr.mxu0 %v108
    %199 = vmatpush1.msra.mxu0 %v107
    %200 = vmatprep.subr.mxu0 %v112
    %201 = vmatpush1.msra.mxu0 %v111
    %202 = vmatprep.subr.mxu0 %v116
    %203 = vmatpush1.msra.mxu0 %v115
    %204 = vmatprep.subr.mxu0 0.0
    %205 = vmatpush1.msra.mxu0 0.0
    %206 = vmatprep.subr.mxu0 0.0
    %207 = vmatpush1.msra.mxu0 0.0
    %208 = vmatprep.subr.mxu0 0.0
    %209 = vmatpush1.msra.mxu0 0.0
    %210 = vmatprep.subr.mxu0 0.0
    %211 = vmatpush1.msra.mxu0 0.0
    %212 = vmatprep.subr.mxu0 0.0
    %213 = vmatpush1.msra.mxu0 0.0
    %214 = vmatprep.subr.mxu0 0.0
    %215 = vmatpush1.msra.mxu0 0.0
    %216 = vmatprep.subr.mxu0 0.0
    %217 = vmatpush1.msra.mxu0 0.0
    %218 = vmatprep.subr.mxu0 0.0
    %219 = vmatpush1.msra.mxu0 0.0
    %220 = vmatprep.subr.mxu0 0.0
    %221 = vmatpush1.msra.mxu0 0.0
    %222 = vmatprep.subr.mxu0 0.0
    %223 = vmatpush1.msra.mxu0 0.0
    %224 = vmatprep.subr.mxu0 0.0
    %225 = vmatpush1.msra.mxu0 0.0
    %226 = vmatprep.subr.mxu0 0.0
    %227 = vmatpush1.msra.mxu0 0.0
    %228 = vmatprep.subr.mxu0 0.0
    %229 = vmatpush1.msra.mxu0 0.0
    %230 = vmatprep.subr.mxu0 0.0
    %231 = vmatpush1.msra.mxu0 0.0
    %232 = vmatprep.subr.mxu0 0.0
    %233 = vmatpush1.msra.mxu0 0.0
    %234 = vmatprep.subr.mxu0 0.0
    %235 = vmatpush1.msra.mxu0 0.0
    %236 = vmatprep.subr.mxu0 0.0
    %237 = vmatpush1.msra.mxu0 0.0
    %238 = vmatprep.subr.mxu0 0.0
    %239 = vmatpush1.msra.mxu0 0.0
    %240 = vmatprep.subr.mxu0 0.0
    %241 = vmatpush1.msra.mxu0 0.0
    %242 = vmatprep.subr.mxu0 0.0
    %243 = vmatpush1.msra.mxu0 0.0
    %244 = vmatprep.subr.mxu0 0.0
    %245 = vmatpush1.msra.mxu0 0.0
    %246 = vmatprep.subr.mxu0 0.0
    %247 = vmatpush1.msra.mxu0 0.0
    %248 = vmatprep.subr.mxu0 0.0
    %249 = vmatpush1.msra.mxu0 0.0
    %250 = vmatprep.subr.mxu0 0.0
    %251 = vmatpush1.msra.mxu0 0.0
    %252 = vmatprep.mubr.f32.mxu0 0.0
    %253 = vmatmul.mubr.f32.gmra.mrb[0].mxu0 %v184
    %v254 = vpop.f32.mrb[0].mxu0
    %v255 = vadd.f32 %v124, %v254
    %v256 = vpop.f32.mrb[0].mxu0
    %v257 = vadd.f32 %v128, %v256
    %258 = vmatprep.mubr.f32.mxu0 0.0
    %259 = vmatmul.mubr.f32.gmra.mrb[0].mxu0 %v186
    %v260 = vpop.f32.mrb[0].mxu0
    %v261 = vadd.f32 %v124, %v260
    %v262 = vpop.f32.mrb[0].mxu0
    %v263 = vadd.f32 %v128, %v262
    %264 = vdwg.mxu0
    %265 = vmatprep.subr.mxu0 %v90
    %266 = vmatpush1.msra.mxu0 %v89
    %267 = vmatprep.subr.mxu0 %v94
    %268 = vmatpush1.msra.mxu0 %v93
    %269 = vmatprep.subr.mxu0 %v98
    %270 = vmatpush1.msra.mxu0 %v97
    %271 = vmatprep.subr.mxu0 %v102
    %272 = vmatpush1.msra.mxu0 %v101
    %273 = vmatprep.subr.mxu0 %v106
    %274 = vmatpush1.msra.mxu0 %v105
    %275 = vmatprep.subr.mxu0 %v110
    %276 = vmatpush1.msra.mxu0 %v109
    %277 = vmatprep.subr.mxu0 %v114
    %278 = vmatpush1.msra.mxu0 %v113
    %279 = vmatprep.subr.mxu0 %v118
    %280 = vmatpush1.msra.mxu0 %v117
    %281 = vmatprep.subr.mxu0 0.0
    %282 = vmatpush1.msra.mxu0 0.0
    %283 = vmatprep.subr.mxu0 0.0
    %284 = vmatpush1.msra.mxu0 0.0
    %285 = vmatprep.subr.mxu0 0.0
    %286 = vmatpush1.msra.mxu0 0.0
    %287 = vmatprep.subr.mxu0 0.0
    %288 = vmatpush1.msra.mxu0 0.0
    %289 = vmatprep.subr.mxu0 0.0
    %290 = vmatpush1.msra.mxu0 0.0
    %291 = vmatprep.subr.mxu0 0.0
    %292 = vmatpush1.msra.mxu0 0.0
    %293 = vmatprep.subr.mxu0 0.0
    %294 = vmatpush1.msra.mxu0 0.0
    %295 = vmatprep.subr.mxu0 0.0
    %296 = vmatpush1.msra.mxu0 0.0
    %297 = vmatprep.subr.mxu0 0.0
    %298 = vmatpush1.msra.mxu0 0.0
    %299 = vmatprep.subr.mxu0 0.0
    %300 = vmatpush1.msra.mxu0 0.0
    %301 = vmatprep.subr.mxu0 0.0
    %302 = vmatpush1.msra.mxu0 0.0
    %303 = vmatprep.subr.mxu0 0.0
    %304 = vmatpush1.msra.mxu0 0.0
    %305 = vmatprep.subr.mxu0 0.0
    %306 = vmatpush1.msra.mxu0 0.0
    %307 = vmatprep.subr.mxu0 0.0
    %308 = vmatpush1.msra.mxu0 0.0
    %309 = vmatprep.subr.mxu0 0.0
    %310 = vmatpush1.msra.mxu0 0.0
    %311 = vmatprep.subr.mxu0 0.0
    %312 = vmatpush1.msra.mxu0 0.0
    %313 = vmatprep.subr.mxu0 0.0
    %314 = vmatpush1.msra.mxu0 0.0
    %315 = vmatprep.subr.mxu0 0.0
    %316 = vmatpush1.msra.mxu0 0.0
    %317 = vmatprep.subr.mxu0 0.0
    %318 = vmatpush1.msra.mxu0 0.0
    %319 = vmatprep.subr.mxu0 0.0
    %320 = vmatpush1.msra.mxu0 0.0
    %321 = vmatprep.subr.mxu0 0.0
    %322 = vmatpush1.msra.mxu0 0.0
    %323 = vmatprep.subr.mxu0 0.0
    %324 = vmatpush1.msra.mxu0 0.0
    %325 = vmatprep.subr.mxu0 0.0
    %326 = vmatpush1.msra.mxu0 0.0
    %327 = vmatprep.subr.mxu0 0.0
    %328 = vmatpush1.msra.mxu0 0.0
    %329 = vmatprep.mubr.f32.mxu0 0.0
    %330 = vmatmul.mubr.f32.gmra.mrb[0].mxu0 %v184
    %v331 = vpop.f32.mrb[0].mxu0
    %v332 = vadd.f32 %v132, %v331
    %v333 = vpop.f32.mrb[0].mxu0
    %v334 = vadd.f32 %v136, %v333
    %335 = vmatprep.mubr.f32.mxu0 0.0
    %336 = vmatmul.mubr.f32.gmra.mrb[0].mxu0 %v186
    %v337 = vpop.f32.mrb[0].mxu0
    %v338 = vadd.f32 %v132, %v337
    %v339 = vpop.f32.mrb[0].mxu0
    %v340 = vadd.f32 %v136, %v339
    %341 = vdwg.mxu0
    %v342 = vld [vmem:[#allocation7] sm:$0xff]
    %v343 = vld [vmem:[#allocation7 + $0x8] sm:$0xff]
    %v344 = vld [vmem:[#allocation7 + $0x10] sm:$0xff]
    %v345 = vld [vmem:[#allocation7 + $0x18] sm:$0xff]
    %v346 = vld [vmem:[#allocation7 + $0x20] sm:$0xff]
    %v347 = vld [vmem:[#allocation7 + $0x28] sm:$0xff]
    %v348 = vld [vmem:[#allocation7 + $0x30] sm:$0xff]
    %v349 = vld [vmem:[#allocation7 + $0x38] sm:$0xff]
    %v350 = vld [vmem:[#allocation7 + $0x40] sm:$0xff]
    %v351 = vld [vmem:[#allocation7 + $0x48] sm:$0xff]
    %v352 = vld [vmem:[#allocation7 + $0x50] sm:$0xff]
    %v353 = vld [vmem:[#allocation7 + $0x58] sm:$0xff]
    %v354 = vld [vmem:[#allocation7 + $0x60] sm:$0xff]
    %v355 = vld [vmem:[#allocation7 + $0x68] sm:$0xff]
    %v356 = vld [vmem:[#allocation7 + $0x70] sm:$0xff]
    %v357 = vld [vmem:[#allocation7 + $0x78] sm:$0xff]
    %v358 = vld [vmem:[#allocation7 + $0x80] sm:$0xff]
    %v359 = vld [vmem:[#allocation7 + $0x88] sm:$0xff]
    %v360 = vld [vmem:[#allocation7 + $0x90] sm:$0xff]
    %v361 = vld [vmem:[#allocation7 + $0x98] sm:$0xff]
    %v362 = vld [vmem:[#allocation7 + $0xa0] sm:$0xff]
    %v363 = vld [vmem:[#allocation7 + $0xa8] sm:$0xff]
    %v364 = vld [vmem:[#allocation7 + $0xb0] sm:$0xff]
    %v365 = vld [vmem:[#allocation7 + $0xb8] sm:$0xff]
    %v366 = vld [vmem:[#allocation7 + $0xc0] sm:$0xff]
    %v367 = vld [vmem:[#allocation7 + $0xc8] sm:$0xff]
    %v368 = vld [vmem:[#allocation7 + $0xd0] sm:$0xff]
    %v369 = vld [vmem:[#allocation7 + $0xd8] sm:$0xff]
    %v370 = vld [vmem:[#allocation7 + $0xe0] sm:$0xff]
    %v371 = vld [vmem:[#allocation7 + $0xe8] sm:$0xff]
    %v372 = vld [vmem:[#allocation7 + $0xf0] sm:$0xff]
    %v373 = vld [vmem:[#allocation7 + $0xf8] sm:$0xff]
    %v374 = vld [vmem:[#allocation7 + $0x100] sm:$0xff]
    %v375 = vld [vmem:[#allocation7 + $0x108] sm:$0xff]
    %v376 = vld [vmem:[#allocation7 + $0x110] sm:$0xff]
    %v377 = vld [vmem:[#allocation7 + $0x118] sm:$0xff]
    %v378 = vld [vmem:[#allocation7 + $0x120] sm:$0xff]
    %v379 = vld [vmem:[#allocation7 + $0x128] sm:$0xff]
    %v380 = vld [vmem:[#allocation7 + $0x130] sm:$0xff]
    %v381 = vld [vmem:[#allocation7 + $0x138] sm:$0xff]
    %v382 = vld [vmem:[#allocation7 + $0x140] sm:$0xff]
    %v383 = vld [vmem:[#allocation7 + $0x148] sm:$0xff]
    %v384 = vld [vmem:[#allocation7 + $0x150] sm:$0xff]
    %v385 = vld [vmem:[#allocation7 + $0x158] sm:$0xff]
    %v386 = vld [vmem:[#allocation7 + $0x160] sm:$0xff]
    %v387 = vld [vmem:[#allocation7 + $0x168] sm:$0xff]
    %v388 = vld [vmem:[#allocation7 + $0x170] sm:$0xff]
    %v389 = vld [vmem:[#allocation7 + $0x178] sm:$0xff]
    %v390 = vld [vmem:[#allocation7 + $0x180] sm:$0xff]
    %v391 = vld [vmem:[#allocation7 + $0x188] sm:$0xff]
    %v392 = vld [vmem:[#allocation7 + $0x190] sm:$0xff]
    %v393 = vld [vmem:[#allocation7 + $0x198] sm:$0xff]
    %v394 = vld [vmem:[#allocation7 + $0x1a0] sm:$0xff]
    %v395 = vld [vmem:[#allocation7 + $0x1a8] sm:$0xff]
    %v396 = vld [vmem:[#allocation7 + $0x1b0] sm:$0xff]
    %v397 = vld [vmem:[#allocation7 + $0x1b8] sm:$0xff]
    %v398 = vld [vmem:[#allocation7 + $0x1c0] sm:$0xff]
    %v399 = vld [vmem:[#allocation7 + $0x1c8] sm:$0xff]
    %v400 = vld [vmem:[#allocation7 + $0x1d0] sm:$0xff]
    %v401 = vld [vmem:[#allocation7 + $0x1d8] sm:$0xff]
    %v402 = vld [vmem:[#allocation7 + $0x1e0] sm:$0xff]
    %v403 = vld [vmem:[#allocation7 + $0x1e8] sm:$0xff]
    %v404 = vld [vmem:[#allocation7 + $0x1f0] sm:$0xff]
    %v405 = vld [vmem:[#allocation7 + $0x1f8] sm:$0xff]
    %406 = vmatprep.subr.mxu0 %v343
    %407 = vmatpush1.msra.mxu0 %v342
    %408 = vmatprep.subr.mxu0 %v347
    %409 = vmatpush1.msra.mxu0 %v346
    %410 = vmatprep.subr.mxu0 %v351
    %411 = vmatpush1.msra.mxu0 %v350
    %412 = vmatprep.subr.mxu0 %v355
    %413 = vmatpush1.msra.mxu0 %v354
    %414 = vmatprep.subr.mxu0 %v359
    %415 = vmatpush1.msra.mxu0 %v358
    %416 = vmatprep.subr.mxu0 %v363
    %417 = vmatpush1.msra.mxu0 %v362
    %418 = vmatprep.subr.mxu0 %v367
    %419 = vmatpush1.msra.mxu0 %v366
    %420 = vmatprep.subr.mxu0 %v371
    %421 = vmatpush1.msra.mxu0 %v370
    %422 = vmatprep.subr.mxu0 %v375
    %423 = vmatpush1.msra.mxu0 %v374
    %424 = vmatprep.subr.mxu0 %v379
    %425 = vmatpush1.msra.mxu0 %v378
    %426 = vmatprep.subr.mxu0 %v383
    %427 = vmatpush1.msra.mxu0 %v382
    %428 = vmatprep.subr.mxu0 %v387
    %429 = vmatpush1.msra.mxu0 %v386
    %430 = vmatprep.subr.mxu0 %v391
    %431 = vmatpush1.msra.mxu0 %v390
    %432 = vmatprep.subr.mxu0 %v395
    %433 = vmatpush1.msra.mxu0 %v394
    %434 = vmatprep.subr.mxu0 %v399
    %435 = vmatpush1.msra.mxu0 %v398
    %436 = vmatprep.subr.mxu0 %v403
    %437 = vmatpush1.msra.mxu0 %v402
    %438 = vmatprep.subr.mxu0 0.0
    %439 = vmatpush1.msra.mxu0 0.0
    %440 = vmatprep.subr.mxu0 0.0
    %441 = vmatpush1.msra.mxu0 0.0
    %442 = vmatprep.subr.mxu0 0.0
    %443 = vmatpush1.msra.mxu0 0.0
    %444 = vmatprep.subr.mxu0 0.0
    %445 = vmatpush1.msra.mxu0 0.0
    %446 = vmatprep.subr.mxu0 0.0
    %447 = vmatpush1.msra.mxu0 0.0
    %448 = vmatprep.subr.mxu0 0.0
    %449 = vmatpush1.msra.mxu0 0.0
    %450 = vmatprep.subr.mxu0 0.0
    %451 = vmatpush1.msra.mxu0 0.0
    %452 = vmatprep.subr.mxu0 0.0
    %453 = vmatpush1.msra.mxu0 0.0
    %454 = vmatprep.subr.mxu0 0.0
    %455 = vmatpush1.msra.mxu0 0.0
    %456 = vmatprep.subr.mxu0 0.0
    %457 = vmatpush1.msra.mxu0 0.0
    %458 = vmatprep.subr.mxu0 0.0
    %459 = vmatpush1.msra.mxu0 0.0
    %460 = vmatprep.subr.mxu0 0.0
    %461 = vmatpush1.msra.mxu0 0.0
    %462 = vmatprep.subr.mxu0 0.0
    %463 = vmatpush1.msra.mxu0 0.0
    %464 = vmatprep.subr.mxu0 0.0
    %465 = vmatpush1.msra.mxu0 0.0
    %466 = vmatprep.subr.mxu0 0.0
    %467 = vmatpush1.msra.mxu0 0.0
    %468 = vmatprep.subr.mxu0 0.0
    %469 = vmatpush1.msra.mxu0 0.0
    %470 = vmatprep.mubr.f32.mxu0 0.0
    %471 = vmatmul.mubr.f32.gmra.mrb[0].mxu0 0.0
    %v472 = vpop.f32.mrb[0].mxu0
    %v473 = vadd.f32 0.0, %v472
    %v474 = vpop.f32.mrb[0].mxu0
    %v475 = vadd.f32 0.0, %v474
    %476 = vdwg.mxu0
    %477 = vmatprep.subr.mxu0 %v345
    %478 = vmatpush1.msra.mxu0 %v344
    %479 = vmatprep.subr.mxu0 %v349
    %480 = vmatpush1.msra.mxu0 %v348
    %481 = vmatprep.subr.mxu0 %v353
    %482 = vmatpush1.msra.mxu0 %v352
    %483 = vmatprep.subr.mxu0 %v357
    %484 = vmatpush1.msra.mxu0 %v356
    %485 = vmatprep.subr.mxu0 %v361
    %486 = vmatpush1.msra.mxu0 %v360
    %487 = vmatprep.subr.mxu0 %v365
    %488 = vmatpush1.msra.mxu0 %v364
    %489 = vmatprep.subr.mxu0 %v369
    %490 = vmatpush1.msra.mxu0 %v368
    %491 = vmatprep.subr.mxu0 %v373
    %492 = vmatpush1.msra.mxu0 %v372
    %493 = vmatprep.subr.mxu0 %v377
    %494 = vmatpush1.msra.mxu0 %v376
    %495 = vmatprep.subr.mxu0 %v381
    %496 = vmatpush1.msra.mxu0 %v380
    %497 = vmatprep.subr.mxu0 %v385
    %498 = vmatpush1.msra.mxu0 %v384
    %499 = vmatprep.subr.mxu0 %v389
    %500 = vmatpush1.msra.mxu0 %v388
    %501 = vmatprep.subr.mxu0 %v393
    %502 = vmatpush1.msra.mxu0 %v392
    %503 = vmatprep.subr.mxu0 %v397
    %504 = vmatpush1.msra.mxu0 %v396
    %505 = vmatprep.subr.mxu0 %v401
    %506 = vmatpush1.msra.mxu0 %v400
    %507 = vmatprep.subr.mxu0 %v405
    %508 = vmatpush1.msra.mxu0 %v404
    %509 = vmatprep.subr.mxu0 0.0
    %510 = vmatpush1.msra.mxu0 0.0
    %511 = vmatprep.subr.mxu0 0.0
    %512 = vmatpush1.msra.mxu0 0.0
    %513 = vmatprep.subr.mxu0 0.0
    %514 = vmatpush1.msra.mxu0 0.0
    %515 = vmatprep.subr.mxu0 0.0
    %516 = vmatpush1.msra.mxu0 0.0
    %517 = vmatprep.subr.mxu0 0.0
    %518 = vmatpush1.msra.mxu0 0.0
    %519 = vmatprep.subr.mxu0 0.0
    %520 = vmatpush1.msra.mxu0 0.0
    %521 = vmatprep.subr.mxu0 0.0
    %522 = vmatpush1.msra.mxu0 0.0
    %523 = vmatprep.subr.mxu0 0.0
    %524 = vmatpush1.msra.mxu0 0.0
    %525 = vmatprep.subr.mxu0 0.0
    %526 = vmatpush1.msra.mxu0 0.0
    %527 = vmatprep.subr.mxu0 0.0
    %528 = vmatpush1.msra.mxu0 0.0
    %529 = vmatprep.subr.mxu0 0.0
    %530 = vmatpush1.msra.mxu0 0.0
    %531 = vmatprep.subr.mxu0 0.0
    %532 = vmatpush1.msra.mxu0 0.0
    %533 = vmatprep.subr.mxu0 0.0
    %534 = vmatpush1.msra.mxu0 0.0
    %535 = vmatprep.subr.mxu0 0.0
    %536 = vmatpush1.msra.mxu0 0.0
    %537 = vmatprep.subr.mxu0 0.0
    %538 = vmatpush1.msra.mxu0 0.0
    %539 = vmatprep.subr.mxu0 0.0
    %540 = vmatpush1.msra.mxu0 0.0
    %541 = vmatprep.mubr.f32.mxu0 0.0
    %542 = vmatmul.mubr.f32.gmra.mrb[0].mxu0 0.0
    %v543 = vpop.f32.mrb[0].mxu0
    %v544 = vadd.f32 0.0, %v543
    %v545 = vpop.f32.mrb[0].mxu0
    %v546 = vadd.f32 0.0, %v545
    %547 = vdwg.mxu0
    %v548 = vadd.f32 %v255, %v473
    %v549 = vadd.f32 %v257, %v475
    %v550 = vadd.f32 %v332, %v544
    %v551 = vadd.f32 %v334, %v546
    %v552 = vxor.u32 %v548, 2147483648
    %v553 = vmul.f32 %v552, 1.442695
    %v554 = vpow.pop %v553
    %v555 = vadd.f32 %v554, 1.0
    %v556 = vrcp.pop %v555
    %v557 = vmul.f32 1.0, %v556
    %v558 = vxor.u32 %v549, 2147483648
    %v559 = vmul.f32 %v558, 1.442695
    %v560 = vpow.pop %v559
    %v561 = vadd.f32 %v560, 1.0
    %v562 = vrcp.pop %v561
    %v563 = vmul.f32 1.0, %v562
    %v564 = vtanh.pop %v550
    %v565 = vxor.u32 %v551, 2147483648
    %v566 = vmul.f32 %v565, 1.442695
    %v567 = vpow.pop %v566
    %v568 = vadd.f32 %v567, 1.0
    %v569 = vrcp.pop %v568
    %v570 = vmul.f32 1.0, %v569
    %v571 = vmul.f32 %v563, 0.0
    %v572 = vmul.f32 %v557, %v564
    %v573 = vadd.f32 %v571, %v572
    %v574 = vtanh.pop %v573
    %v575 = vmul.f32 %v570, %v574
    %576 = vmatprep.subr.mxu0 %v343
    %577 = vmatpush1.msra.mxu0 %v342
    %578 = vmatprep.subr.mxu0 %v347
    %579 = vmatpush1.msra.mxu0 %v346
    %580 = vmatprep.subr.mxu0 %v351
    %581 = vmatpush1.msra.mxu0 %v350
    %582 = vmatprep.subr.mxu0 %v355
    %583 = vmatpush1.msra.mxu0 %v354
    %584 = vmatprep.subr.mxu0 %v359
    %585 = vmatpush1.msra.mxu0 %v358
    %586 = vmatprep.subr.mxu0 %v363
    %587 = vmatpush1.msra.mxu0 %v362
    %588 = vmatprep.subr.mxu0 %v367
    %589 = vmatpush1.msra.mxu0 %v366
    %590 = vmatprep.subr.mxu0 %v371
    %591 = vmatpush1.msra.mxu0 %v370
    %592 = vmatprep.subr.mxu0 %v375
    %593 = vmatpush1.msra.mxu0 %v374
    %594 = vmatprep.subr.mxu0 %v379
    %595 = vmatpush1.msra.mxu0 %v378
    %596 = vmatprep.subr.mxu0 %v383
    %597 = vmatpush1.msra.mxu0 %v382
    %598 = vmatprep.subr.mxu0 %v387
    %599 = vmatpush1.msra.mxu0 %v386
    %600 = vmatprep.subr.mxu0 %v391
    %601 = vmatpush1.msra.mxu0 %v390
    %602 = vmatprep.subr.mxu0 %v395
    %603 = vmatpush1.msra.mxu0 %v394
    %604 = vmatprep.subr.mxu0 %v399
    %605 = vmatpush1.msra.mxu0 %v398
    %606 = vmatprep.subr.mxu0 %v403
    %607 = vmatpush1.msra.mxu0 %v402
    %608 = vmatprep.subr.mxu0 0.0
    %609 = vmatpush1.msra.mxu0 0.0
    %610 = vmatprep.subr.mxu0 0.0
    %611 = vmatpush1.msra.mxu0 0.0
    %612 = vmatprep.subr.mxu0 0.0
    %613 = vmatpush1.msra.mxu0 0.0
    %614 = vmatprep.subr.mxu0 0.0
    %615 = vmatpush1.msra.mxu0 0.0
    %616 = vmatprep.subr.mxu0 0.0
    %617 = vmatpush1.msra.mxu0 0.0
    %618 = vmatprep.subr.mxu0 0.0
    %619 = vmatpush1.msra.mxu0 0.0
    %620 = vmatprep.subr.mxu0 0.0
    %621 = vmatpush1.msra.mxu0 0.0
    %622 = vmatprep.subr.mxu0 0.0
    %623 = vmatpush1.msra.mxu0 0.0
    %624 = vmatprep.subr.mxu0 0.0
    %625 = vmatpush1.msra.mxu0 0.0
    %626 = vmatprep.subr.mxu0 0.0
    %627 = vmatpush1.msra.mxu0 0.0
    %628 = vmatprep.subr.mxu0 0.0
    %629 = vmatpush1.msra.mxu0 0.0
    %630 = vmatprep.subr.mxu0 0.0
    %631 = vmatpush1.msra.mxu0 0.0
    %632 = vmatprep.subr.mxu0 0.0
    %633 = vmatpush1.msra.mxu0 0.0
    %634 = vmatprep.subr.mxu0 0.0
    %635 = vmatpush1.msra.mxu0 0.0
    %636 = vmatprep.subr.mxu0 0.0
    %637 = vmatpush1.msra.mxu0 0.0
    %638 = vmatprep.subr.mxu0 0.0
    %639 = vmatpush1.msra.mxu0 0.0
    %640 = vmatprep.mubr.f32.mxu0 0.0
    %641 = vmatmul.mubr.f32.gmra.mrb[0].mxu0 %v575
    %v642 = vpop.f32.mrb[0].mxu0
    %v643 = vadd.f32 0.0, %v642
    %v644 = vpop.f32.mrb[0].mxu0
    %v645 = vadd.f32 0.0, %v644
    %646 = vdwg.mxu0
    %647 = vmatprep.subr.mxu0 %v345
    %648 = vmatpush1.msra.mxu0 %v344
    %649 = vmatprep.subr.mxu0 %v349
    %650 = vmatpush1.msra.mxu0 %v348
    %651 = vmatprep.subr.mxu0 %v353
    %652 = vmatpush1.msra.mxu0 %v352
    %653 = vmatprep.subr.mxu0 %v357
    %654 = vmatpush1.msra.mxu0 %v356
    %655 = vmatprep.subr.mxu0 %v361
    %656 = vmatpush1.msra.mxu0 %v360
    %657 = vmatprep.subr.mxu0 %v365
    %658 = vmatpush1.msra.mxu0 %v364
    %659 = vmatprep.subr.mxu0 %v369
    %660 = vmatpush1.msra.mxu0 %v368
    %661 = vmatprep.subr.mxu0 %v373
    %662 = vmatpush1.msra.mxu0 %v372
    %663 = vmatprep.subr.mxu0 %v377
    %664 = vmatpush1.msra.mxu0 %v376
    %665 = vmatprep.subr.mxu0 %v381
    %666 = vmatpush1.msra.mxu0 %v380
    %667 = vmatprep.subr.mxu0 %v385
    %668 = vmatpush1.msra.mxu0 %v384
    %669 = vmatprep.subr.mxu0 %v389
    %670 = vmatpush1.msra.mxu0 %v388
    %671 = vmatprep.subr.mxu0 %v393
    %672 = vmatpush1.msra.mxu0 %v392
    %673 = vmatprep.subr.mxu0 %v397
    %674 = vmatpush1.msra.mxu0 %v396
    %675 = vmatprep.subr.mxu0 %v401
    %676 = vmatpush1.msra.mxu0 %v400
    %677 = vmatprep.subr.mxu0 %v405
    %678 = vmatpush1.msra.mxu0 %v404
    %679 = vmatprep.subr.mxu0 0.0
    %680 = vmatpush1.msra.mxu0 0.0
    %681 = vmatprep.subr.mxu0 0.0
    %682 = vmatpush1.msra.mxu0 0.0
    %683 = vmatprep.subr.mxu0 0.0
    %684 = vmatpush1.msra.mxu0 0.0
    %685 = vmatprep.subr.mxu0 0.0
    %686 = vmatpush1.msra.mxu0 0.0
    %687 = vmatprep.subr.mxu0 0.0
    %688 = vmatpush1.msra.mxu0 0.0
    %689 = vmatprep.subr.mxu0 0.0
    %690 = vmatpush1.msra.mxu0 0.0
    %691 = vmatprep.subr.mxu0 0.0
    %692 = vmatpush1.msra.mxu0 0.0
    %693 = vmatprep.subr.mxu0 0.0
    %694 = vmatpush1.msra.mxu0 0.0
    %695 = vmatprep.subr.mxu0 0.0
    %696 = vmatpush1.msra.mxu0 0.0
    %697 = vmatprep.subr.mxu0 0.0
    %698 = vmatpush1.msra.mxu0 0.0
    %699 = vmatprep.subr.mxu0 0.0
    %700 = vmatpush1.msra.mxu0 0.0
    %701 = vmatprep.subr.mxu0 0.0
    %702 = vmatpush1.msra.mxu0 0.0
    %703 = vmatprep.subr.mxu0 0.0
    %704 = vmatpush1.msra.mxu0 0.0
    %705 = vmatprep.subr.mxu0 0.0
    %706 = vmatpush1.msra.mxu0 0.0
    %707 = vmatprep.subr.mxu0 0.0
    %708 = vmatpush1.msra.mxu0 0.0
    %709 = vmatprep.subr.mxu0 0.0
    %710 = vmatpush1.msra.mxu0 0.0
    %711 = vmatprep.mubr.f32.mxu0 0.0
    %712 = vmatmul.mubr.f32.gmra.mrb[0].mxu0 %v575
    %v713 = vpop.f32.mrb[0].mxu0
    %v714 = vadd.f32 0.0, %v713
    %v715 = vpop.f32.mrb[0].mxu0
    %v716 = vadd.f32 0.0, %v715
    %717 = vdwg.mxu0
    %v722 = vrot.slane %v643, 6
    %v723 = vrot.slane %v645, 6
    %v724 = vrot.slane %v714, 6
    %v725 = vrot.slane %v716, 6
    %v730 = vadd.f32 %v255, %v722
    %v731 = vadd.f32 %v257, %v723
    %v732 = vadd.f32 %v332, %v724
    %v733 = vadd.f32 %v334, %v725
    %v734 = vxor.u32 %v730, 2147483648
    %v735 = vmul.f32 %v734, 1.442695
    %v736 = vpow.pop %v735
    %v737 = vadd.f32 %v736, 1.0
    %v738 = vrcp.pop %v737
    %v739 = vmul.f32 1.0, %v738
    %v740 = vxor.u32 %v731, 2147483648
    %v741 = vmul.f32 %v740, 1.442695
    %v742 = vpow.pop %v741
    %v743 = vadd.f32 %v742, 1.0
    %v744 = vrcp.pop %v743
    %v745 = vmul.f32 1.0, %v744
    %v746 = vtanh.pop %v732
    %v747 = vxor.u32 %v733, 2147483648
    %v748 = vmul.f32 %v747, 1.442695
    %v749 = vpow.pop %v748
    %v750 = vadd.f32 %v749, 1.0
    %v751 = vrcp.pop %v750
    %v752 = vmul.f32 1.0, %v751
    %v754 = vrot.slane %v573, 6
    %v756 = vmul.f32 %v745, %v754
    %v757 = vmul.f32 %v739, %v746
    %v758 = vadd.f32 %v756, %v757
    %v759 = vtanh.pop %v758
    %v760 = vmul.f32 %v752, %v759
    %v762 = vrot.slane %v760, 2
    %764 = vmatprep.subr.mxu0 %v343
    %765 = vmatpush1.msra.mxu0 %v342
    %766 = vmatprep.subr.mxu0 %v347
    %767 = vmatpush1.msra.mxu0 %v346
    %768 = vmatprep.subr.mxu0 %v351
    %769 = vmatpush1.msra.mxu0 %v350
    %770 = vmatprep.subr.mxu0 %v355
    %771 = vmatpush1.msra.mxu0 %v354
    %772 = vmatprep.subr.mxu0 %v359
    %773 = vmatpush1.msra.mxu0 %v358
    %774 = vmatprep.subr.mxu0 %v363
    %775 = vmatpush1.msra.mxu0 %v362
    %776 = vmatprep.subr.mxu0 %v367
    %777 = vmatpush1.msra.mxu0 %v366
    %778 = vmatprep.subr.mxu0 %v371
    %779 = vmatpush1.msra.mxu0 %v370
    %780 = vmatprep.subr.mxu0 %v375
    %781 = vmatpush1.msra.mxu0 %v374
    %782 = vmatprep.subr.mxu0 %v379
    %783 = vmatpush1.msra.mxu0 %v378
    %784 = vmatprep.subr.mxu0 %v383
    %785 = vmatpush1.msra.mxu0 %v382
    %786 = vmatprep.subr.mxu0 %v387
    %787 = vmatpush1.msra.mxu0 %v386
    %788 = vmatprep.subr.mxu0 %v391
    %789 = vmatpush1.msra.mxu0 %v390
    %790 = vmatprep.subr.mxu0 %v395
    %791 = vmatpush1.msra.mxu0 %v394
    %792 = vmatprep.subr.mxu0 %v399
    %793 = vmatpush1.msra.mxu0 %v398
    %794 = vmatprep.subr.mxu0 %v403
    %795 = vmatpush1.msra.mxu0 %v402
    %796 = vmatprep.subr.mxu0 0.0
    %797 = vmatpush1.msra.mxu0 0.0
    %798 = vmatprep.subr.mxu0 0.0
    %799 = vmatpush1.msra.mxu0 0.0
    %800 = vmatprep.subr.mxu0 0.0
    %801 = vmatpush1.msra.mxu0 0.0
    %802 = vmatprep.subr.mxu0 0.0
    %803 = vmatpush1.msra.mxu0 0.0
    %804 = vmatprep.subr.mxu0 0.0
    %805 = vmatpush1.msra.mxu0 0.0
    %806 = vmatprep.subr.mxu0 0.0
    %807 = vmatpush1.msra.mxu0 0.0
    %808 = vmatprep.subr.mxu0 0.0
    %809 = vmatpush1.msra.mxu0 0.0
    %810 = vmatprep.subr.mxu0 0.0
    %811 = vmatpush1.msra.mxu0 0.0
    %812 = vmatprep.subr.mxu0 0.0
    %813 = vmatpush1.msra.mxu0 0.0
    %814 = vmatprep.subr.mxu0 0.0
    %815 = vmatpush1.msra.mxu0 0.0
    %816 = vmatprep.subr.mxu0 0.0
    %817 = vmatpush1.msra.mxu0 0.0
    %818 = vmatprep.subr.mxu0 0.0
    %819 = vmatpush1.msra.mxu0 0.0
    %820 = vmatprep.subr.mxu0 0.0
    %821 = vmatpush1.msra.mxu0 0.0
    %822 = vmatprep.subr.mxu0 0.0
    %823 = vmatpush1.msra.mxu0 0.0
    %824 = vmatprep.subr.mxu0 0.0
    %825 = vmatpush1.msra.mxu0 0.0
    %826 = vmatprep.subr.mxu0 0.0
    %827 = vmatpush1.msra.mxu0 0.0
    %828 = vmatprep.mubr.f32.mxu0 0.0
    %829 = vmatmul.mubr.f32.gmra.mrb[0].mxu0 %v762
    %v830 = vpop.f32.mrb[0].mxu0
    %v831 = vadd.f32 0.0, %v830
    %v832 = vpop.f32.mrb[0].mxu0
    %v833 = vadd.f32 0.0, %v832
    %834 = vdwg.mxu0
    %835 = vmatprep.subr.mxu0 %v345
    %836 = vmatpush1.msra.mxu0 %v344
    %837 = vmatprep.subr.mxu0 %v349
    %838 = vmatpush1.msra.mxu0 %v348
    %839 = vmatprep.subr.mxu0 %v353
    %840 = vmatpush1.msra.mxu0 %v352
    %841 = vmatprep.subr.mxu0 %v357
    %842 = vmatpush1.msra.mxu0 %v356
    %843 = vmatprep.subr.mxu0 %v361
    %844 = vmatpush1.msra.mxu0 %v360
    %845 = vmatprep.subr.mxu0 %v365
    %846 = vmatpush1.msra.mxu0 %v364
    %847 = vmatprep.subr.mxu0 %v369
    %848 = vmatpush1.msra.mxu0 %v368
    %849 = vmatprep.subr.mxu0 %v373
    %850 = vmatpush1.msra.mxu0 %v372
    %851 = vmatprep.subr.mxu0 %v377
    %852 = vmatpush1.msra.mxu0 %v376
    %853 = vmatprep.subr.mxu0 %v381
    %854 = vmatpush1.msra.mxu0 %v380
    %855 = vmatprep.subr.mxu0 %v385
    %856 = vmatpush1.msra.mxu0 %v384
    %857 = vmatprep.subr.mxu0 %v389
    %858 = vmatpush1.msra.mxu0 %v388
    %859 = vmatprep.subr.mxu0 %v393
    %860 = vmatpush1.msra.mxu0 %v392
    %861 = vmatprep.subr.mxu0 %v397
    %862 = vmatpush1.msra.mxu0 %v396
    %863 = vmatprep.subr.mxu0 %v401
    %864 = vmatpush1.msra.mxu0 %v400
    %865 = vmatprep.subr.mxu0 %v405
    %866 = vmatpush1.msra.mxu0 %v404
    %867 = vmatprep.subr.mxu0 0.0
    %868 = vmatpush1.msra.mxu0 0.0
    %869 = vmatprep.subr.mxu0 0.0
    %870 = vmatpush1.msra.mxu0 0.0
    %871 = vmatprep.subr.mxu0 0.0
    %872 = vmatpush1.msra.mxu0 0.0
    %873 = vmatprep.subr.mxu0 0.0
    %874 = vmatpush1.msra.mxu0 0.0
    %875 = vmatprep.subr.mxu0 0.0
    %876 = vmatpush1.msra.mxu0 0.0
    %877 = vmatprep.subr.mxu0 0.0
    %878 = vmatpush1.msra.mxu0 0.0
    %879 = vmatprep.subr.mxu0 0.0
    %880 = vmatpush1.msra.mxu0 0.0
    %881 = vmatprep.subr.mxu0 0.0
    %882 = vmatpush1.msra.mxu0 0.0
    %883 = vmatprep.subr.mxu0 0.0
    %884 = vmatpush1.msra.mxu0 0.0
    %885 = vmatprep.subr.mxu0 0.0
    %886 = vmatpush1.msra.mxu0 0.0
    %887 = vmatprep.subr.mxu0 0.0
    %888 = vmatpush1.msra.mxu0 0.0
    %889 = vmatprep.subr.mxu0 0.0
    %890 = vmatpush1.msra.mxu0 0.0
    %891 = vmatprep.subr.mxu0 0.0
    %892 = vmatpush1.msra.mxu0 0.0
    %893 = vmatprep.subr.mxu0 0.0
    %894 = vmatpush1.msra.mxu0 0.0
    %895 = vmatprep.subr.mxu0 0.0
    %896 = vmatpush1.msra.mxu0 0.0
    %897 = vmatprep.subr.mxu0 0.0
    %898 = vmatpush1.msra.mxu0 0.0
    %899 = vmatprep.mubr.f32.mxu0 0.0
    %900 = vmatmul.mubr.f32.gmra.mrb[0].mxu0 %v762
    %v901 = vpop.f32.mrb[0].mxu0
    %v902 = vadd.f32 0.0, %v901
    %v903 = vpop.f32.mrb[0].mxu0
    %v904 = vadd.f32 0.0, %v903
    %905 = vdwg.mxu0
    %v910 = vrot.slane %v831, 4
    %v911 = vrot.slane %v833, 4
    %v912 = vrot.slane %v902, 4
    %v913 = vrot.slane %v904, 4
    %v918 = vadd.f32 %v255, %v910
    %v919 = vadd.f32 %v257, %v911
    %v920 = vadd.f32 %v332, %v912
    %v921 = vadd.f32 %v334, %v913
    %v922 = vxor.u32 %v918, 2147483648
    %v923 = vmul.f32 %v922, 1.442695
    %v924 = vpow.pop %v923
    %v925 = vadd.f32 %v924, 1.0
    %v926 = vrcp.pop %v925
    %v927 = vmul.f32 1.0, %v926
    %v928 = vxor.u32 %v919, 2147483648
    %v929 = vmul.f32 %v928, 1.442695
    %v930 = vpow.pop %v929
    %v931 = vadd.f32 %v930, 1.0
    %v932 = vrcp.pop %v931
    %v933 = vmul.f32 1.0, %v932
    %v934 = vtanh.pop %v920
    %v935 = vxor.u32 %v921, 2147483648
    %v936 = vmul.f32 %v935, 1.442695
    %v937 = vpow.pop %v936
    %v938 = vadd.f32 %v937, 1.0
    %v939 = vrcp.pop %v938
    %v940 = vmul.f32 1.0, %v939
    %v942 = vrot.slane %v758, 6
    %v944 = vmul.f32 %v933, %v942
    %v945 = vmul.f32 %v927, %v934
    %v946 = vadd.f32 %v944, %v945
    %v947 = vtanh.pop %v946
    %v948 = vmul.f32 %v940, %v947
    %v950 = vrot.slane %v948, 4
    %952 = vmatprep.subr.mxu0 %v343
    %953 = vmatpush1.msra.mxu0 %v342
    %954 = vmatprep.subr.mxu0 %v347
    %955 = vmatpush1.msra.mxu0 %v346
    %956 = vmatprep.subr.mxu0 %v351
    %957 = vmatpush1.msra.mxu0 %v350
    %958 = vmatprep.subr.mxu0 %v355
    %959 = vmatpush1.msra.mxu0 %v354
    %960 = vmatprep.subr.mxu0 %v359
    %961 = vmatpush1.msra.mxu0 %v358
    %962 = vmatprep.subr.mxu0 %v363
    %963 = vmatpush1.msra.mxu0 %v362
    %964 = vmatprep.subr.mxu0 %v367
    %965 = vmatpush1.msra.mxu0 %v366
    %966 = vmatprep.subr.mxu0 %v371
    %967 = vmatpush1.msra.mxu0 %v370
    %968 = vmatprep.subr.mxu0 %v375
    %969 = vmatpush1.msra.mxu0 %v374
    %970 = vmatprep.subr.mxu0 %v379
    %971 = vmatpush1.msra.mxu0 %v378
    %972 = vmatprep.subr.mxu0 %v383
    %973 = vmatpush1.msra.mxu0 %v382
    %974 = vmatprep.subr.mxu0 %v387
    %975 = vmatpush1.msra.mxu0 %v386
    %976 = vmatprep.subr.mxu0 %v391
    %977 = vmatpush1.msra.mxu0 %v390
    %978 = vmatprep.subr.mxu0 %v395
    %979 = vmatpush1.msra.mxu0 %v394
    %980 = vmatprep.subr.mxu0 %v399
    %981 = vmatpush1.msra.mxu0 %v398
    %982 = vmatprep.subr.mxu0 %v403
    %983 = vmatpush1.msra.mxu0 %v402
    %984 = vmatprep.subr.mxu0 0.0
    %985 = vmatpush1.msra.mxu0 0.0
    %986 = vmatprep.subr.mxu0 0.0
    %987 = vmatpush1.msra.mxu0 0.0
    %988 = vmatprep.subr.mxu0 0.0
    %989 = vmatpush1.msra.mxu0 0.0
    %990 = vmatprep.subr.mxu0 0.0
    %991 = vmatpush1.msra.mxu0 0.0
    %992 = vmatprep.subr.mxu0 0.0
    %993 = vmatpush1.msra.mxu0 0.0
    %994 = vmatprep.subr.mxu0 0.0
    %995 = vmatpush1.msra.mxu0 0.0
    %996 = vmatprep.subr.mxu0 0.0
    %997 = vmatpush1.msra.mxu0 0.0
    %998 = vmatprep.subr.mxu0 0.0
    %999 = vmatpush1.msra.mxu0 0.0
    %1000 = vmatprep.subr.mxu0 0.0
    %1001 = vmatpush1.msra.mxu0 0.0
    %1002 = vmatprep.subr.mxu0 0.0
    %1003 = vmatpush1.msra.mxu0 0.0
    %1004 = vmatprep.subr.mxu0 0.0
    %1005 = vmatpush1.msra.mxu0 0.0
    %1006 = vmatprep.subr.mxu0 0.0
    %1007 = vmatpush1.msra.mxu0 0.0
    %1008 = vmatprep.subr.mxu0 0.0
    %1009 = vmatpush1.msra.mxu0 0.0
    %1010 = vmatprep.subr.mxu0 0.0
    %1011 = vmatpush1.msra.mxu0 0.0
    %1012 = vmatprep.subr.mxu0 0.0
    %1013 = vmatpush1.msra.mxu0 0.0
    %1014 = vmatprep.subr.mxu0 0.0
    %1015 = vmatpush1.msra.mxu0 0.0
    %1016 = vmatprep.mubr.f32.mxu0 0.0
    %1017 = vmatmul.mubr.f32.gmra.mrb[0].mxu0 %v950
    %v1018 = vpop.f32.mrb[0].mxu0
    %v1019 = vadd.f32 0.0, %v1018
    %v1020 = vpop.f32.mrb[0].mxu0
    %v1021 = vadd.f32 0.0, %v1020
    %1022 = vdwg.mxu0
    %1023 = vmatprep.subr.mxu0 %v345
    %1024 = vmatpush1.msra.mxu0 %v344
    %1025 = vmatprep.subr.mxu0 %v349
    %1026 = vmatpush1.msra.mxu0 %v348
    %1027 = vmatprep.subr.mxu0 %v353
    %1028 = vmatpush1.msra.mxu0 %v352
    %1029 = vmatprep.subr.mxu0 %v357
    %1030 = vmatpush1.msra.mxu0 %v356
    %1031 = vmatprep.subr.mxu0 %v361
    %1032 = vmatpush1.msra.mxu0 %v360
    %1033 = vmatprep.subr.mxu0 %v365
    %1034 = vmatpush1.msra.mxu0 %v364
    %1035 = vmatprep.subr.mxu0 %v369
    %1036 = vmatpush1.msra.mxu0 %v368
    %1037 = vmatprep.subr.mxu0 %v373
    %1038 = vmatpush1.msra.mxu0 %v372
    %1039 = vmatprep.subr.mxu0 %v377
    %1040 = vmatpush1.msra.mxu0 %v376
    %1041 = vmatprep.subr.mxu0 %v381
    %1042 = vmatpush1.msra.mxu0 %v380
    %1043 = vmatprep.subr.mxu0 %v385
    %1044 = vmatpush1.msra.mxu0 %v384
    %1045 = vmatprep.subr.mxu0 %v389
    %1046 = vmatpush1.msra.mxu0 %v388
    %1047 = vmatprep.subr.mxu0 %v393
    %1048 = vmatpush1.msra.mxu0 %v392
    %1049 = vmatprep.subr.mxu0 %v397
    %1050 = vmatpush1.msra.mxu0 %v396
    %1051 = vmatprep.subr.mxu0 %v401
    %1052 = vmatpush1.msra.mxu0 %v400
    %1053 = vmatprep.subr.mxu0 %v405
    %1054 = vmatpush1.msra.mxu0 %v404
    %1055 = vmatprep.subr.mxu0 0.0
    %1056 = vmatpush1.msra.mxu0 0.0
    %1057 = vmatprep.subr.mxu0 0.0
    %1058 = vmatpush1.msra.mxu0 0.0
    %1059 = vmatprep.subr.mxu0 0.0
    %1060 = vmatpush1.msra.mxu0 0.0
    %1061 = vmatprep.subr.mxu0 0.0
    %1062 = vmatpush1.msra.mxu0 0.0
    %1063 = vmatprep.subr.mxu0 0.0
    %1064 = vmatpush1.msra.mxu0 0.0
    %1065 = vmatprep.subr.mxu0 0.0
    %1066 = vmatpush1.msra.mxu0 0.0
    %1067 = vmatprep.subr.mxu0 0.0
    %1068 = vmatpush1.msra.mxu0 0.0
    %1069 = vmatprep.subr.mxu0 0.0
    %1070 = vmatpush1.msra.mxu0 0.0
    %1071 = vmatprep.subr.mxu0 0.0
    %1072 = vmatpush1.msra.mxu0 0.0
    %1073 = vmatprep.subr.mxu0 0.0
    %1074 = vmatpush1.msra.mxu0 0.0
    %1075 = vmatprep.subr.mxu0 0.0
    %1076 = vmatpush1.msra.mxu0 0.0
    %1077 = vmatprep.subr.mxu0 0.0
    %1078 = vmatpush1.msra.mxu0 0.0
    %1079 = vmatprep.subr.mxu0 0.0
    %1080 = vmatpush1.msra.mxu0 0.0
    %1081 = vmatprep.subr.mxu0 0.0
    %1082 = vmatpush1.msra.mxu0 0.0
    %1083 = vmatprep.subr.mxu0 0.0
    %1084 = vmatpush1.msra.mxu0 0.0
    %1085 = vmatprep.subr.mxu0 0.0
    %1086 = vmatpush1.msra.mxu0 0.0
    %1087 = vmatprep.mubr.f32.mxu0 0.0
    %1088 = vmatmul.mubr.f32.gmra.mrb[0].mxu0 %v950
    %v1089 = vpop.f32.mrb[0].mxu0
    %v1090 = vadd.f32 0.0, %v1089
    %v1091 = vpop.f32.mrb[0].mxu0
    %v1092 = vadd.f32 0.0, %v1091
    %1093 = vdwg.mxu0
    %v1098 = vrot.slane %v1019, 2
    %v1099 = vrot.slane %v1021, 2
    %v1100 = vrot.slane %v1090, 2
    %v1101 = vrot.slane %v1092, 2
    %v1106 = vadd.f32 %v255, %v1098
    %v1107 = vadd.f32 %v257, %v1099
    %v1108 = vadd.f32 %v332, %v1100
    %v1109 = vadd.f32 %v334, %v1101
    %v1110 = vxor.u32 %v1106, 2147483648
    %v1111 = vmul.f32 %v1110, 1.442695
    %v1112 = vpow.pop %v1111
    %v1113 = vadd.f32 %v1112, 1.0
    %v1114 = vrcp.pop %v1113
    %v1115 = vmul.f32 1.0, %v1114
    %v1116 = vxor.u32 %v1107, 2147483648
    %v1117 = vmul.f32 %v1116, 1.442695
    %v1118 = vpow.pop %v1117
    %v1119 = vadd.f32 %v1118, 1.0
    %v1120 = vrcp.pop %v1119
    %v1121 = vmul.f32 1.0, %v1120
    %v1122 = vtanh.pop %v1108
    %v1123 = vxor.u32 %v1109, 2147483648
    %v1124 = vmul.f32 %v1123, 1.442695
    %v1125 = vpow.pop %v1124
    %v1126 = vadd.f32 %v1125, 1.0
    %v1127 = vrcp.pop %v1126
    %v1128 = vmul.f32 1.0, %v1127
    %v1130 = vrot.slane %v946, 6
    %v1132 = vmul.f32 %v1121, %v1130
    %v1133 = vmul.f32 %v1115, %v1122
    %v1134 = vadd.f32 %v1132, %v1133
    %v1135 = vtanh.pop %v1134
    %v1136 = vmul.f32 %v1128, %v1135
    %v1138 = vrot.slane %v1136, 6
    %1140 = vmatprep.subr.mxu0 %v343
    %1141 = vmatpush1.msra.mxu0 %v342
    %1142 = vmatprep.subr.mxu0 %v347
    %1143 = vmatpush1.msra.mxu0 %v346
    %1144 = vmatprep.subr.mxu0 %v351
    %1145 = vmatpush1.msra.mxu0 %v350
    %1146 = vmatprep.subr.mxu0 %v355
    %1147 = vmatpush1.msra.mxu0 %v354
    %1148 = vmatprep.subr.mxu0 %v359
    %1149 = vmatpush1.msra.mxu0 %v358
    %1150 = vmatprep.subr.mxu0 %v363
    %1151 = vmatpush1.msra.mxu0 %v362
    %1152 = vmatprep.subr.mxu0 %v367
    %1153 = vmatpush1.msra.mxu0 %v366
    %1154 = vmatprep.subr.mxu0 %v371
    %1155 = vmatpush1.msra.mxu0 %v370
    %1156 = vmatprep.subr.mxu0 %v375
    %1157 = vmatpush1.msra.mxu0 %v374
    %1158 = vmatprep.subr.mxu0 %v379
    %1159 = vmatpush1.msra.mxu0 %v378
    %1160 = vmatprep.subr.mxu0 %v383
    %1161 = vmatpush1.msra.mxu0 %v382
    %1162 = vmatprep.subr.mxu0 %v387
    %1163 = vmatpush1.msra.mxu0 %v386
    %1164 = vmatprep.subr.mxu0 %v391
    %1165 = vmatpush1.msra.mxu0 %v390
    %1166 = vmatprep.subr.mxu0 %v395
    %1167 = vmatpush1.msra.mxu0 %v394
    %1168 = vmatprep.subr.mxu0 %v399
    %1169 = vmatpush1.msra.mxu0 %v398
    %1170 = vmatprep.subr.mxu0 %v403
    %1171 = vmatpush1.msra.mxu0 %v402
    %1172 = vmatprep.subr.mxu0 0.0
    %1173 = vmatpush1.msra.mxu0 0.0
    %1174 = vmatprep.subr.mxu0 0.0
    %1175 = vmatpush1.msra.mxu0 0.0
    %1176 = vmatprep.subr.mxu0 0.0
    %1177 = vmatpush1.msra.mxu0 0.0
    %1178 = vmatprep.subr.mxu0 0.0
    %1179 = vmatpush1.msra.mxu0 0.0
    %1180 = vmatprep.subr.mxu0 0.0
    %1181 = vmatpush1.msra.mxu0 0.0
    %1182 = vmatprep.subr.mxu0 0.0
    %1183 = vmatpush1.msra.mxu0 0.0
    %1184 = vmatprep.subr.mxu0 0.0
    %1185 = vmatpush1.msra.mxu0 0.0
    %1186 = vmatprep.subr.mxu0 0.0
    %1187 = vmatpush1.msra.mxu0 0.0
    %1188 = vmatprep.subr.mxu0 0.0
    %1189 = vmatpush1.msra.mxu0 0.0
    %1190 = vmatprep.subr.mxu0 0.0
    %1191 = vmatpush1.msra.mxu0 0.0
    %1192 = vmatprep.subr.mxu0 0.0
    %1193 = vmatpush1.msra.mxu0 0.0
    %1194 = vmatprep.subr.mxu0 0.0
    %1195 = vmatpush1.msra.mxu0 0.0
    %1196 = vmatprep.subr.mxu0 0.0
    %1197 = vmatpush1.msra.mxu0 0.0
    %1198 = vmatprep.subr.mxu0 0.0
    %1199 = vmatpush1.msra.mxu0 0.0
    %1200 = vmatprep.subr.mxu0 0.0
    %1201 = vmatpush1.msra.mxu0 0.0
    %1202 = vmatprep.subr.mxu0 0.0
    %1203 = vmatpush1.msra.mxu0 0.0
    %1204 = vmatprep.mubr.f32.mxu0 0.0
    %1205 = vmatmul.mubr.f32.gmra.mrb[0].mxu0 %v1138
    %v1206 = vpop.f32.mrb[0].mxu0
    %v1207 = vadd.f32 0.0, %v1206
    %v1208 = vpop.f32.mrb[0].mxu0
    %v1209 = vadd.f32 0.0, %v1208
    %1210 = vdwg.mxu0
    %1211 = vmatprep.subr.mxu0 %v345
    %1212 = vmatpush1.msra.mxu0 %v344
    %1213 = vmatprep.subr.mxu0 %v349
    %1214 = vmatpush1.msra.mxu0 %v348
    %1215 = vmatprep.subr.mxu0 %v353
    %1216 = vmatpush1.msra.mxu0 %v352
    %1217 = vmatprep.subr.mxu0 %v357
    %1218 = vmatpush1.msra.mxu0 %v356
    %1219 = vmatprep.subr.mxu0 %v361
    %1220 = vmatpush1.msra.mxu0 %v360
    %1221 = vmatprep.subr.mxu0 %v365
    %1222 = vmatpush1.msra.mxu0 %v364
    %1223 = vmatprep.subr.mxu0 %v369
    %1224 = vmatpush1.msra.mxu0 %v368
    %1225 = vmatprep.subr.mxu0 %v373
    %1226 = vmatpush1.msra.mxu0 %v372
    %1227 = vmatprep.subr.mxu0 %v377
    %1228 = vmatpush1.msra.mxu0 %v376
    %1229 = vmatprep.subr.mxu0 %v381
    %1230 = vmatpush1.msra.mxu0 %v380
    %1231 = vmatprep.subr.mxu0 %v385
    %1232 = vmatpush1.msra.mxu0 %v384
    %1233 = vmatprep.subr.mxu0 %v389
    %1234 = vmatpush1.msra.mxu0 %v388
    %1235 = vmatprep.subr.mxu0 %v393
    %1236 = vmatpush1.msra.mxu0 %v392
    %1237 = vmatprep.subr.mxu0 %v397
    %1238 = vmatpush1.msra.mxu0 %v396
    %1239 = vmatprep.subr.mxu0 %v401
    %1240 = vmatpush1.msra.mxu0 %v400
    %1241 = vmatprep.subr.mxu0 %v405
    %1242 = vmatpush1.msra.mxu0 %v404
    %1243 = vmatprep.subr.mxu0 0.0
    %1244 = vmatpush1.msra.mxu0 0.0
    %1245 = vmatprep.subr.mxu0 0.0
    %1246 = vmatpush1.msra.mxu0 0.0
    %1247 = vmatprep.subr.mxu0 0.0
    %1248 = vmatpush1.msra.mxu0 0.0
    %1249 = vmatprep.subr.mxu0 0.0
    %1250 = vmatpush1.msra.mxu0 0.0
    %1251 = vmatprep.subr.mxu0 0.0
    %1252 = vmatpush1.msra.mxu0 0.0
    %1253 = vmatprep.subr.mxu0 0.0
    %1254 = vmatpush1.msra.mxu0 0.0
    %1255 = vmatprep.subr.mxu0 0.0
    %1256 = vmatpush1.msra.mxu0 0.0
    %1257 = vmatprep.subr.mxu0 0.0
    %1258 = vmatpush1.msra.mxu0 0.0
    %1259 = vmatprep.subr.mxu0 0.0
    %1260 = vmatpush1.msra.mxu0 0.0
    %1261 = vmatprep.subr.mxu0 0.0
    %1262 = vmatpush1.msra.mxu0 0.0
    %1263 = vmatprep.subr.mxu0 0.0
    %1264 = vmatpush1.msra.mxu0 0.0
    %1265 = vmatprep.subr.mxu0 0.0
    %1266 = vmatpush1.msra.mxu0 0.0
    %1267 = vmatprep.subr.mxu0 0.0
    %1268 = vmatpush1.msra.mxu0 0.0
    %1269 = vmatprep.subr.mxu0 0.0
    %1270 = vmatpush1.msra.mxu0 0.0
    %1271 = vmatprep.subr.mxu0 0.0
    %1272 = vmatpush1.msra.mxu0 0.0
    %1273 = vmatprep.subr.mxu0 0.0
    %1274 = vmatpush1.msra.mxu0 0.0
    %1275 = vmatprep.mubr.f32.mxu0 0.0
    %1276 = vmatmul.mubr.f32.gmra.mrb[0].mxu0 %v1138
    %v1277 = vpop.f32.mrb[0].mxu0
    %v1278 = vadd.f32 0.0, %v1277
    %v1279 = vpop.f32.mrb[0].mxu0
    %v1280 = vadd.f32 0.0, %v1279
    %1281 = vdwg.mxu0
    %v1282 = vadd.f32 %v261, %v1207
    %v1283 = vadd.f32 %v263, %v1209
    %v1284 = vadd.f32 %v338, %v1278
    %v1285 = vadd.f32 %v340, %v1280
    %v1286 = vxor.u32 %v1282, 2147483648
    %v1287 = vmul.f32 %v1286, 1.442695
    %v1288 = vpow.pop %v1287
    %v1289 = vadd.f32 %v1288, 1.0
    %v1290 = vrcp.pop %v1289
    %v1291 = vmul.f32 1.0, %v1290
    %v1292 = vxor.u32 %v1283, 2147483648
    %v1293 = vmul.f32 %v1292, 1.442695
    %v1294 = vpow.pop %v1293
    %v1295 = vadd.f32 %v1294, 1.0
    %v1296 = vrcp.pop %v1295
    %v1297 = vmul.f32 1.0, %v1296
    %v1298 = vtanh.pop %v1284
    %v1299 = vxor.u32 %v1285, 2147483648
    %v1300 = vmul.f32 %v1299, 1.442695
    %v1301 = vpow.pop %v1300
    %v1302 = vadd.f32 %v1301, 1.0
    %v1303 = vrcp.pop %v1302
    %v1304 = vmul.f32 1.0, %v1303
    %v1306 = vrot.slane %v1134, 6
    %v1308 = vmul.f32 %v1297, %v1306
    %v1309 = vmul.f32 %v1291, %v1298
    %v1310 = vadd.f32 %v1308, %v1309
    %v1311 = vtanh.pop %v1310
    %v1312 = vmul.f32 %v1304, %v1311
    %1313 = vmatprep.subr.mxu0 %v343
    %1314 = vmatpush1.msra.mxu0 %v342
    %1315 = vmatprep.subr.mxu0 %v347
    %1316 = vmatpush1.msra.mxu0 %v346
    %1317 = vmatprep.subr.mxu0 %v351
    %1318 = vmatpush1.msra.mxu0 %v350
    %1319 = vmatprep.subr.mxu0 %v355
    %1320 = vmatpush1.msra.mxu0 %v354
    %1321 = vmatprep.subr.mxu0 %v359
    %1322 = vmatpush1.msra.mxu0 %v358
    %1323 = vmatprep.subr.mxu0 %v363
    %1324 = vmatpush1.msra.mxu0 %v362
    %1325 = vmatprep.subr.mxu0 %v367
    %1326 = vmatpush1.msra.mxu0 %v366
    %1327 = vmatprep.subr.mxu0 %v371
    %1328 = vmatpush1.msra.mxu0 %v370
    %1329 = vmatprep.subr.mxu0 %v375
    %1330 = vmatpush1.msra.mxu0 %v374
    %1331 = vmatprep.subr.mxu0 %v379
    %1332 = vmatpush1.msra.mxu0 %v378
    %1333 = vmatprep.subr.mxu0 %v383
    %1334 = vmatpush1.msra.mxu0 %v382
    %1335 = vmatprep.subr.mxu0 %v387
    %1336 = vmatpush1.msra.mxu0 %v386
    %1337 = vmatprep.subr.mxu0 %v391
    %1338 = vmatpush1.msra.mxu0 %v390
    %1339 = vmatprep.subr.mxu0 %v395
    %1340 = vmatpush1.msra.mxu0 %v394
    %1341 = vmatprep.subr.mxu0 %v399
    %1342 = vmatpush1.msra.mxu0 %v398
    %1343 = vmatprep.subr.mxu0 %v403
    %1344 = vmatpush1.msra.mxu0 %v402
    %1345 = vmatprep.subr.mxu0 0.0
    %1346 = vmatpush1.msra.mxu0 0.0
    %1347 = vmatprep.subr.mxu0 0.0
    %1348 = vmatpush1.msra.mxu0 0.0
    %1349 = vmatprep.subr.mxu0 0.0
    %1350 = vmatpush1.msra.mxu0 0.0
    %1351 = vmatprep.subr.mxu0 0.0
    %1352 = vmatpush1.msra.mxu0 0.0
    %1353 = vmatprep.subr.mxu0 0.0
    %1354 = vmatpush1.msra.mxu0 0.0
    %1355 = vmatprep.subr.mxu0 0.0
    %1356 = vmatpush1.msra.mxu0 0.0
    %1357 = vmatprep.subr.mxu0 0.0
    %1358 = vmatpush1.msra.mxu0 0.0
    %1359 = vmatprep.subr.mxu0 0.0
    %1360 = vmatpush1.msra.mxu0 0.0
    %1361 = vmatprep.subr.mxu0 0.0
    %1362 = vmatpush1.msra.mxu0 0.0
    %1363 = vmatprep.subr.mxu0 0.0
    %1364 = vmatpush1.msra.mxu0 0.0
    %1365 = vmatprep.subr.mxu0 0.0
    %1366 = vmatpush1.msra.mxu0 0.0
    %1367 = vmatprep.subr.mxu0 0.0
    %1368 = vmatpush1.msra.mxu0 0.0
    %1369 = vmatprep.subr.mxu0 0.0
    %1370 = vmatpush1.msra.mxu0 0.0
    %1371 = vmatprep.subr.mxu0 0.0
    %1372 = vmatpush1.msra.mxu0 0.0
    %1373 = vmatprep.subr.mxu0 0.0
    %1374 = vmatpush1.msra.mxu0 0.0
    %1375 = vmatprep.subr.mxu0 0.0
    %1376 = vmatpush1.msra.mxu0 0.0
    %1377 = vmatprep.mubr.f32.mxu0 0.0
    %1378 = vmatmul.mubr.f32.gmra.mrb[0].mxu0 %v1312
    %v1379 = vpop.f32.mrb[0].mxu0
    %v1380 = vadd.f32 0.0, %v1379
    %v1381 = vpop.f32.mrb[0].mxu0
    %v1382 = vadd.f32 0.0, %v1381
    %1383 = vdwg.mxu0
    %1384 = vmatprep.subr.mxu0 %v345
    %1385 = vmatpush1.msra.mxu0 %v344
    %1386 = vmatprep.subr.mxu0 %v349
    %1387 = vmatpush1.msra.mxu0 %v348
    %1388 = vmatprep.subr.mxu0 %v353
    %1389 = vmatpush1.msra.mxu0 %v352
    %1390 = vmatprep.subr.mxu0 %v357
    %1391 = vmatpush1.msra.mxu0 %v356
    %1392 = vmatprep.subr.mxu0 %v361
    %1393 = vmatpush1.msra.mxu0 %v360
    %1394 = vmatprep.subr.mxu0 %v365
    %1395 = vmatpush1.msra.mxu0 %v364
    %1396 = vmatprep.subr.mxu0 %v369
    %1397 = vmatpush1.msra.mxu0 %v368
    %1398 = vmatprep.subr.mxu0 %v373
    %1399 = vmatpush1.msra.mxu0 %v372
    %1400 = vmatprep.subr.mxu0 %v377
    %1401 = vmatpush1.msra.mxu0 %v376
    %1402 = vmatprep.subr.mxu0 %v381
    %1403 = vmatpush1.msra.mxu0 %v380
    %1404 = vmatprep.subr.mxu0 %v385
    %1405 = vmatpush1.msra.mxu0 %v384
    %1406 = vmatprep.subr.mxu0 %v389
    %1407 = vmatpush1.msra.mxu0 %v388
    %1408 = vmatprep.subr.mxu0 %v393
    %1409 = vmatpush1.msra.mxu0 %v392
    %1410 = vmatprep.subr.mxu0 %v397
    %1411 = vmatpush1.msra.mxu0 %v396
    %1412 = vmatprep.subr.mxu0 %v401
    %1413 = vmatpush1.msra.mxu0 %v400
    %1414 = vmatprep.subr.mxu0 %v405
    %1415 = vmatpush1.msra.mxu0 %v404
    %1416 = vmatprep.subr.mxu0 0.0
    %1417 = vmatpush1.msra.mxu0 0.0
    %1418 = vmatprep.subr.mxu0 0.0
    %1419 = vmatpush1.msra.mxu0 0.0
    %1420 = vmatprep.subr.mxu0 0.0
    %1421 = vmatpush1.msra.mxu0 0.0
    %1422 = vmatprep.subr.mxu0 0.0
    %1423 = vmatpush1.msra.mxu0 0.0
    %1424 = vmatprep.subr.mxu0 0.0
    %1425 = vmatpush1.msra.mxu0 0.0
    %1426 = vmatprep.subr.mxu0 0.0
    %1427 = vmatpush1.msra.mxu0 0.0
    %1428 = vmatprep.subr.mxu0 0.0
    %1429 = vmatpush1.msra.mxu0 0.0
    %1430 = vmatprep.subr.mxu0 0.0
    %1431 = vmatpush1.msra.mxu0 0.0
    %1432 = vmatprep.subr.mxu0 0.0
    %1433 = vmatpush1.msra.mxu0 0.0
    %1434 = vmatprep.subr.mxu0 0.0
    %1435 = vmatpush1.msra.mxu0 0.0
    %1436 = vmatprep.subr.mxu0 0.0
    %1437 = vmatpush1.msra.mxu0 0.0
    %1438 = vmatprep.subr.mxu0 0.0
    %1439 = vmatpush1.msra.mxu0 0.0
    %1440 = vmatprep.subr.mxu0 0.0
    %1441 = vmatpush1.msra.mxu0 0.0
    %1442 = vmatprep.subr.mxu0 0.0
    %1443 = vmatpush1.msra.mxu0 0.0
    %1444 = vmatprep.subr.mxu0 0.0
    %1445 = vmatpush1.msra.mxu0 0.0
    %1446 = vmatprep.subr.mxu0 0.0
    %1447 = vmatpush1.msra.mxu0 0.0
    %1448 = vmatprep.mubr.f32.mxu0 0.0
    %1449 = vmatmul.mubr.f32.gmra.mrb[0].mxu0 %v1312
    %v1450 = vpop.f32.mrb[0].mxu0
    %v1451 = vadd.f32 0.0, %v1450
    %v1452 = vpop.f32.mrb[0].mxu0
    %v1453 = vadd.f32 0.0, %v1452
    %1454 = vdwg.mxu0
    %v1459 = vrot.slane %v1380, 6
    %v1460 = vrot.slane %v1382, 6
    %v1461 = vrot.slane %v1451, 6
    %v1462 = vrot.slane %v1453, 6
    %v1467 = vadd.f32 %v261, %v1459
    %v1468 = vadd.f32 %v263, %v1460
    %v1469 = vadd.f32 %v338, %v1461
    %v1470 = vadd.f32 %v340, %v1462
    %v1471 = vxor.u32 %v1467, 2147483648
    %v1472 = vmul.f32 %v1471, 1.442695
    %v1473 = vpow.pop %v1472
    %v1474 = vadd.f32 %v1473, 1.0
    %v1475 = vrcp.pop %v1474
    %v1476 = vmul.f32 1.0, %v1475
    %v1477 = vxor.u32 %v1468, 2147483648
    %v1478 = vmul.f32 %v1477, 1.442695
    %v1479 = vpow.pop %v1478
    %v1480 = vadd.f32 %v1479, 1.0
    %v1481 = vrcp.pop %v1480
    %v1482 = vmul.f32 1.0, %v1481
    %v1483 = vtanh.pop %v1469
    %v1484 = vxor.u32 %v1470, 2147483648
    %v1485 = vmul.f32 %v1484, 1.442695
    %v1486 = vpow.pop %v1485
    %v1487 = vadd.f32 %v1486, 1.0
    %v1488 = vrcp.pop %v1487
    %v1489 = vmul.f32 1.0, %v1488
    %v1491 = vrot.slane %v1310, 6
    %v1493 = vmul.f32 %v1482, %v1491
    %v1494 = vmul.f32 %v1476, %v1483
    %v1495 = vadd.f32 %v1493, %v1494
    %v1496 = vtanh.pop %v1495
    %v1497 = vmul.f32 %v1489, %v1496
    %v1499 = vrot.slane %v1497, 2
    %1501 = vmatprep.subr.mxu0 %v343
    %1502 = vmatpush1.msra.mxu0 %v342
    %1503 = vmatprep.subr.mxu0 %v347
    %1504 = vmatpush1.msra.mxu0 %v346
    %1505 = vmatprep.subr.mxu0 %v351
    %1506 = vmatpush1.msra.mxu0 %v350
    %1507 = vmatprep.subr.mxu0 %v355
    %1508 = vmatpush1.msra.mxu0 %v354
    %1509 = vmatprep.subr.mxu0 %v359
    %1510 = vmatpush1.msra.mxu0 %v358
    %1511 = vmatprep.subr.mxu0 %v363
    %1512 = vmatpush1.msra.mxu0 %v362
    %1513 = vmatprep.subr.mxu0 %v367
    %1514 = vmatpush1.msra.mxu0 %v366
    %1515 = vmatprep.subr.mxu0 %v371
    %1516 = vmatpush1.msra.mxu0 %v370
    %1517 = vmatprep.subr.mxu0 %v375
    %1518 = vmatpush1.msra.mxu0 %v374
    %1519 = vmatprep.subr.mxu0 %v379
    %1520 = vmatpush1.msra.mxu0 %v378
    %1521 = vmatprep.subr.mxu0 %v383
    %1522 = vmatpush1.msra.mxu0 %v382
    %1523 = vmatprep.subr.mxu0 %v387
    %1524 = vmatpush1.msra.mxu0 %v386
    %1525 = vmatprep.subr.mxu0 %v391
    %1526 = vmatpush1.msra.mxu0 %v390
    %1527 = vmatprep.subr.mxu0 %v395
    %1528 = vmatpush1.msra.mxu0 %v394
    %1529 = vmatprep.subr.mxu0 %v399
    %1530 = vmatpush1.msra.mxu0 %v398
    %1531 = vmatprep.subr.mxu0 %v403
    %1532 = vmatpush1.msra.mxu0 %v402
    %1533 = vmatprep.subr.mxu0 0.0
    %1534 = vmatpush1.msra.mxu0 0.0
    %1535 = vmatprep.subr.mxu0 0.0
    %1536 = vmatpush1.msra.mxu0 0.0
    %1537 = vmatprep.subr.mxu0 0.0
    %1538 = vmatpush1.msra.mxu0 0.0
    %1539 = vmatprep.subr.mxu0 0.0
    %1540 = vmatpush1.msra.mxu0 0.0
    %1541 = vmatprep.subr.mxu0 0.0
    %1542 = vmatpush1.msra.mxu0 0.0
    %1543 = vmatprep.subr.mxu0 0.0
    %1544 = vmatpush1.msra.mxu0 0.0
    %1545 = vmatprep.subr.mxu0 0.0
    %1546 = vmatpush1.msra.mxu0 0.0
    %1547 = vmatprep.subr.mxu0 0.0
    %1548 = vmatpush1.msra.mxu0 0.0
    %1549 = vmatprep.subr.mxu0 0.0
    %1550 = vmatpush1.msra.mxu0 0.0
    %1551 = vmatprep.subr.mxu0 0.0
    %1552 = vmatpush1.msra.mxu0 0.0
    %1553 = vmatprep.subr.mxu0 0.0
    %1554 = vmatpush1.msra.mxu0 0.0
    %1555 = vmatprep.subr.mxu0 0.0
    %1556 = vmatpush1.msra.mxu0 0.0
    %1557 = vmatprep.subr.mxu0 0.0
    %1558 = vmatpush1.msra.mxu0 0.0
    %1559 = vmatprep.subr.mxu0 0.0
    %1560 = vmatpush1.msra.mxu0 0.0
    %1561 = vmatprep.subr.mxu0 0.0
    %1562 = vmatpush1.msra.mxu0 0.0
    %1563 = vmatprep.subr.mxu0 0.0
    %1564 = vmatpush1.msra.mxu0 0.0
    %1565 = vmatprep.mubr.f32.mxu0 0.0
    %1566 = vmatmul.mubr.f32.gmra.mrb[0].mxu0 %v1499
    %v1567 = vpop.f32.mrb[0].mxu0
    %v1568 = vadd.f32 0.0, %v1567
    %v1569 = vpop.f32.mrb[0].mxu0
    %v1570 = vadd.f32 0.0, %v1569
    %1571 = vdwg.mxu0
    %1572 = vmatprep.subr.mxu0 %v345
    %1573 = vmatpush1.msra.mxu0 %v344
    %1574 = vmatprep.subr.mxu0 %v349
    %1575 = vmatpush1.msra.mxu0 %v348
    %1576 = vmatprep.subr.mxu0 %v353
    %1577 = vmatpush1.msra.mxu0 %v352
    %1578 = vmatprep.subr.mxu0 %v357
    %1579 = vmatpush1.msra.mxu0 %v356
    %1580 = vmatprep.subr.mxu0 %v361
    %1581 = vmatpush1.msra.mxu0 %v360
    %1582 = vmatprep.subr.mxu0 %v365
    %1583 = vmatpush1.msra.mxu0 %v364
    %1584 = vmatprep.subr.mxu0 %v369
    %1585 = vmatpush1.msra.mxu0 %v368
    %1586 = vmatprep.subr.mxu0 %v373
    %1587 = vmatpush1.msra.mxu0 %v372
    %1588 = vmatprep.subr.mxu0 %v377
    %1589 = vmatpush1.msra.mxu0 %v376
    %1590 = vmatprep.subr.mxu0 %v381
    %1591 = vmatpush1.msra.mxu0 %v380
    %1592 = vmatprep.subr.mxu0 %v385
    %1593 = vmatpush1.msra.mxu0 %v384
    %1594 = vmatprep.subr.mxu0 %v389
    %1595 = vmatpush1.msra.mxu0 %v388
    %1596 = vmatprep.subr.mxu0 %v393
    %1597 = vmatpush1.msra.mxu0 %v392
    %1598 = vmatprep.subr.mxu0 %v397
    %1599 = vmatpush1.msra.mxu0 %v396
    %1600 = vmatprep.subr.mxu0 %v401
    %1601 = vmatpush1.msra.mxu0 %v400
    %1602 = vmatprep.subr.mxu0 %v405
    %1603 = vmatpush1.msra.mxu0 %v404
    %1604 = vmatprep.subr.mxu0 0.0
    %1605 = vmatpush1.msra.mxu0 0.0
    %1606 = vmatprep.subr.mxu0 0.0
    %1607 = vmatpush1.msra.mxu0 0.0
    %1608 = vmatprep.subr.mxu0 0.0
    %1609 = vmatpush1.msra.mxu0 0.0
    %1610 = vmatprep.subr.mxu0 0.0
    %1611 = vmatpush1.msra.mxu0 0.0
    %1612 = vmatprep.subr.mxu0 0.0
    %1613 = vmatpush1.msra.mxu0 0.0
    %1614 = vmatprep.subr.mxu0 0.0
    %1615 = vmatpush1.msra.mxu0 0.0
    %1616 = vmatprep.subr.mxu0 0.0
    %1617 = vmatpush1.msra.mxu0 0.0
    %1618 = vmatprep.subr.mxu0 0.0
    %1619 = vmatpush1.msra.mxu0 0.0
    %1620 = vmatprep.subr.mxu0 0.0
    %1621 = vmatpush1.msra.mxu0 0.0
    %1622 = vmatprep.subr.mxu0 0.0
    %1623 = vmatpush1.msra.mxu0 0.0
    %1624 = vmatprep.subr.mxu0 0.0
    %1625 = vmatpush1.msra.mxu0 0.0
    %1626 = vmatprep.subr.mxu0 0.0
    %1627 = vmatpush1.msra.mxu0 0.0
    %1628 = vmatprep.subr.mxu0 0.0
    %1629 = vmatpush1.msra.mxu0 0.0
    %1630 = vmatprep.subr.mxu0 0.0
    %1631 = vmatpush1.msra.mxu0 0.0
    %1632 = vmatprep.subr.mxu0 0.0
    %1633 = vmatpush1.msra.mxu0 0.0
    %1634 = vmatprep.subr.mxu0 0.0
    %1635 = vmatpush1.msra.mxu0 0.0
    %1636 = vmatprep.mubr.f32.mxu0 0.0
    %1637 = vmatmul.mubr.f32.gmra.mrb[0].mxu0 %v1499
    %v1638 = vpop.f32.mrb[0].mxu0
    %v1639 = vadd.f32 0.0, %v1638
    %v1640 = vpop.f32.mrb[0].mxu0
    %v1641 = vadd.f32 0.0, %v1640
    %1642 = vdwg.mxu0
    %v1647 = vrot.slane %v1568, 4
    %v1648 = vrot.slane %v1570, 4
    %v1649 = vrot.slane %v1639, 4
    %v1650 = vrot.slane %v1641, 4
    %v1655 = vadd.f32 %v261, %v1647
    %v1656 = vadd.f32 %v263, %v1648
    %v1657 = vadd.f32 %v338, %v1649
    %v1658 = vadd.f32 %v340, %v1650
    %v1659 = vxor.u32 %v1655, 2147483648
    %v1660 = vmul.f32 %v1659, 1.442695
    %v1661 = vpow.pop %v1660
    %v1662 = vadd.f32 %v1661, 1.0
    %v1663 = vrcp.pop %v1662
    %v1664 = vmul.f32 1.0, %v1663
    %v1665 = vxor.u32 %v1656, 2147483648
    %v1666 = vmul.f32 %v1665, 1.442695
    %v1667 = vpow.pop %v1666
    %v1668 = vadd.f32 %v1667, 1.0
    %v1669 = vrcp.pop %v1668
    %v1670 = vmul.f32 1.0, %v1669
    %v1671 = vtanh.pop %v1657
    %v1672 = vxor.u32 %v1658, 2147483648
    %v1673 = vmul.f32 %v1672, 1.442695
    %v1674 = vpow.pop %v1673
    %v1675 = vadd.f32 %v1674, 1.0
    %v1676 = vrcp.pop %v1675
    %v1677 = vmul.f32 1.0, %v1676
    %v1679 = vrot.slane %v1495, 6
    %v1681 = vmul.f32 %v1670, %v1679
    %v1682 = vmul.f32 %v1664, %v1671
    %v1683 = vadd.f32 %v1681, %v1682
    %v1684 = vtanh.pop %v1683
    %v1685 = vmul.f32 %v1677, %v1684
    %v1687 = vrot.slane %v1685, 4
    %1689 = vmatprep.subr.mxu0 %v343
    %1690 = vmatpush1.msra.mxu0 %v342
    %1691 = vmatprep.subr.mxu0 %v347
    %1692 = vmatpush1.msra.mxu0 %v346
    %1693 = vmatprep.subr.mxu0 %v351
    %1694 = vmatpush1.msra.mxu0 %v350
    %1695 = vmatprep.subr.mxu0 %v355
    %1696 = vmatpush1.msra.mxu0 %v354
    %1697 = vmatprep.subr.mxu0 %v359
    %1698 = vmatpush1.msra.mxu0 %v358
    %1699 = vmatprep.subr.mxu0 %v363
    %1700 = vmatpush1.msra.mxu0 %v362
    %1701 = vmatprep.subr.mxu0 %v367
    %1702 = vmatpush1.msra.mxu0 %v366
    %1703 = vmatprep.subr.mxu0 %v371
    %1704 = vmatpush1.msra.mxu0 %v370
    %1705 = vmatprep.subr.mxu0 %v375
    %1706 = vmatpush1.msra.mxu0 %v374
    %1707 = vmatprep.subr.mxu0 %v379
    %1708 = vmatpush1.msra.mxu0 %v378
    %1709 = vmatprep.subr.mxu0 %v383
    %1710 = vmatpush1.msra.mxu0 %v382
    %1711 = vmatprep.subr.mxu0 %v387
    %1712 = vmatpush1.msra.mxu0 %v386
    %1713 = vmatprep.subr.mxu0 %v391
    %1714 = vmatpush1.msra.mxu0 %v390
    %1715 = vmatprep.subr.mxu0 %v395
    %1716 = vmatpush1.msra.mxu0 %v394
    %1717 = vmatprep.subr.mxu0 %v399
    %1718 = vmatpush1.msra.mxu0 %v398
    %1719 = vmatprep.subr.mxu0 %v403
    %1720 = vmatpush1.msra.mxu0 %v402
    %1721 = vmatprep.subr.mxu0 0.0
    %1722 = vmatpush1.msra.mxu0 0.0
    %1723 = vmatprep.subr.mxu0 0.0
    %1724 = vmatpush1.msra.mxu0 0.0
    %1725 = vmatprep.subr.mxu0 0.0
    %1726 = vmatpush1.msra.mxu0 0.0
    %1727 = vmatprep.subr.mxu0 0.0
    %1728 = vmatpush1.msra.mxu0 0.0
    %1729 = vmatprep.subr.mxu0 0.0
    %1730 = vmatpush1.msra.mxu0 0.0
    %1731 = vmatprep.subr.mxu0 0.0
    %1732 = vmatpush1.msra.mxu0 0.0
    %1733 = vmatprep.subr.mxu0 0.0
    %1734 = vmatpush1.msra.mxu0 0.0
    %1735 = vmatprep.subr.mxu0 0.0
    %1736 = vmatpush1.msra.mxu0 0.0
    %1737 = vmatprep.subr.mxu0 0.0
    %1738 = vmatpush1.msra.mxu0 0.0
    %1739 = vmatprep.subr.mxu0 0.0
    %1740 = vmatpush1.msra.mxu0 0.0
    %1741 = vmatprep.subr.mxu0 0.0
    %1742 = vmatpush1.msra.mxu0 0.0
    %1743 = vmatprep.subr.mxu0 0.0
    %1744 = vmatpush1.msra.mxu0 0.0
    %1745 = vmatprep.subr.mxu0 0.0
    %1746 = vmatpush1.msra.mxu0 0.0
    %1747 = vmatprep.subr.mxu0 0.0
    %1748 = vmatpush1.msra.mxu0 0.0
    %1749 = vmatprep.subr.mxu0 0.0
    %1750 = vmatpush1.msra.mxu0 0.0
    %1751 = vmatprep.subr.mxu0 0.0
    %1752 = vmatpush1.msra.mxu0 0.0
    %1753 = vmatprep.mubr.f32.mxu0 0.0
    %1754 = vmatmul.mubr.f32.gmra.mrb[0].mxu0 %v1687
    %v1755 = vpop.f32.mrb[0].mxu0
    %v1756 = vadd.f32 0.0, %v1755
    %v1757 = vpop.f32.mrb[0].mxu0
    %v1758 = vadd.f32 0.0, %v1757
    %1759 = vdwg.mxu0
    %1760 = vmatprep.subr.mxu0 %v345
    %1761 = vmatpush1.msra.mxu0 %v344
    %1762 = vmatprep.subr.mxu0 %v349
    %1763 = vmatpush1.msra.mxu0 %v348
    %1764 = vmatprep.subr.mxu0 %v353
    %1765 = vmatpush1.msra.mxu0 %v352
    %1766 = vmatprep.subr.mxu0 %v357
    %1767 = vmatpush1.msra.mxu0 %v356
    %1768 = vmatprep.subr.mxu0 %v361
    %1769 = vmatpush1.msra.mxu0 %v360
    %1770 = vmatprep.subr.mxu0 %v365
    %1771 = vmatpush1.msra.mxu0 %v364
    %1772 = vmatprep.subr.mxu0 %v369
    %1773 = vmatpush1.msra.mxu0 %v368
    %1774 = vmatprep.subr.mxu0 %v373
    %1775 = vmatpush1.msra.mxu0 %v372
    %1776 = vmatprep.subr.mxu0 %v377
    %1777 = vmatpush1.msra.mxu0 %v376
    %1778 = vmatprep.subr.mxu0 %v381
    %1779 = vmatpush1.msra.mxu0 %v380
    %1780 = vmatprep.subr.mxu0 %v385
    %1781 = vmatpush1.msra.mxu0 %v384
    %1782 = vmatprep.subr.mxu0 %v389
    %1783 = vmatpush1.msra.mxu0 %v388
    %1784 = vmatprep.subr.mxu0 %v393
    %1785 = vmatpush1.msra.mxu0 %v392
    %1786 = vmatprep.subr.mxu0 %v397
    %1787 = vmatpush1.msra.mxu0 %v396
    %1788 = vmatprep.subr.mxu0 %v401
    %1789 = vmatpush1.msra.mxu0 %v400
    %1790 = vmatprep.subr.mxu0 %v405
    %1791 = vmatpush1.msra.mxu0 %v404
    %1792 = vmatprep.subr.mxu0 0.0
    %1793 = vmatpush1.msra.mxu0 0.0
    %1794 = vmatprep.subr.mxu0 0.0
    %1795 = vmatpush1.msra.mxu0 0.0
    %1796 = vmatprep.subr.mxu0 0.0
    %1797 = vmatpush1.msra.mxu0 0.0
    %1798 = vmatprep.subr.mxu0 0.0
    %1799 = vmatpush1.msra.mxu0 0.0
    %1800 = vmatprep.subr.mxu0 0.0
    %1801 = vmatpush1.msra.mxu0 0.0
    %1802 = vmatprep.subr.mxu0 0.0
    %1803 = vmatpush1.msra.mxu0 0.0
    %1804 = vmatprep.subr.mxu0 0.0
    %1805 = vmatpush1.msra.mxu0 0.0
    %1806 = vmatprep.subr.mxu0 0.0
    %1807 = vmatpush1.msra.mxu0 0.0
    %1808 = vmatprep.subr.mxu0 0.0
    %1809 = vmatpush1.msra.mxu0 0.0
    %1810 = vmatprep.subr.mxu0 0.0
    %1811 = vmatpush1.msra.mxu0 0.0
    %1812 = vmatprep.subr.mxu0 0.0
    %1813 = vmatpush1.msra.mxu0 0.0
    %1814 = vmatprep.subr.mxu0 0.0
    %1815 = vmatpush1.msra.mxu0 0.0
    %1816 = vmatprep.subr.mxu0 0.0
    %1817 = vmatpush1.msra.mxu0 0.0
    %1818 = vmatprep.subr.mxu0 0.0
    %1819 = vmatpush1.msra.mxu0 0.0
    %1820 = vmatprep.subr.mxu0 0.0
    %1821 = vmatpush1.msra.mxu0 0.0
    %1822 = vmatprep.subr.mxu0 0.0
    %1823 = vmatpush1.msra.mxu0 0.0
    %1824 = vmatprep.mubr.f32.mxu0 0.0
    %1825 = vmatmul.mubr.f32.gmra.mrb[0].mxu0 %v1687
    %v1826 = vpop.f32.mrb[0].mxu0
    %v1827 = vadd.f32 0.0, %v1826
    %v1828 = vpop.f32.mrb[0].mxu0
    %v1829 = vadd.f32 0.0, %v1828
    %1830 = vdwg.mxu0
    %v1835 = vrot.slane %v1756, 2
    %v1836 = vrot.slane %v1758, 2
    %v1837 = vrot.slane %v1827, 2
    %v1838 = vrot.slane %v1829, 2
    %v1843 = vadd.f32 %v261, %v1835
    %v1844 = vadd.f32 %v263, %v1836
    %v1845 = vadd.f32 %v338, %v1837
    %v1846 = vadd.f32 %v340, %v1838
    %v1847 = vxor.u32 %v1843, 2147483648
    %v1848 = vmul.f32 %v1847, 1.442695
    %v1849 = vpow.pop %v1848
    %v1850 = vadd.f32 %v1849, 1.0
    %v1851 = vrcp.pop %v1850
    %v1852 = vmul.f32 1.0, %v1851
    %v1853 = vxor.u32 %v1844, 2147483648
    %v1854 = vmul.f32 %v1853, 1.442695
    %v1855 = vpow.pop %v1854
    %v1856 = vadd.f32 %v1855, 1.0
    %v1857 = vrcp.pop %v1856
    %v1858 = vmul.f32 1.0, %v1857
    %v1859 = vtanh.pop %v1845
    %v1860 = vxor.u32 %v1846, 2147483648
    %v1861 = vmul.f32 %v1860, 1.442695
    %v1862 = vpow.pop %v1861
    %v1863 = vadd.f32 %v1862, 1.0
    %v1864 = vrcp.pop %v1863
    %v1865 = vmul.f32 1.0, %v1864
    %v1867 = vrot.slane %v1683, 6
    %v1869 = vmul.f32 %v1858, %v1867
    %v1870 = vmul.f32 %v1852, %v1859
    %v1871 = vadd.f32 %v1869, %v1870
    %v1872 = vtanh.pop %v1871
    %v1873 = vmul.f32 %v1865, %v1872
    %v1874 = vld [vmem:[#allocation8] sm:$0xff]
    %v1875 = vld [vmem:[#allocation8 + $0x8] sm:$0xff]
    %v1876 = vld [vmem:[#allocation8 + $0x10] sm:$0xff]
    %v1877 = vld [vmem:[#allocation8 + $0x18] sm:$0xff]
    %v1878 = vld [vmem:[#allocation8 + $0x20] sm:$0xff]
    %v1879 = vld [vmem:[#allocation8 + $0x28] sm:$0xff]
    %v1880 = vld [vmem:[#allocation8 + $0x30] sm:$0xff]
    %v1881 = vld [vmem:[#allocation8 + $0x38] sm:$0xff]
    %v1882 = vld [vmem:[#allocation8 + $0x40] sm:$0xff]
    %v1883 = vld [vmem:[#allocation8 + $0x48] sm:$0xff]
    %v1884 = vld [vmem:[#allocation8 + $0x50] sm:$0xff]
    %v1885 = vld [vmem:[#allocation8 + $0x58] sm:$0xff]
    %v1886 = vld [vmem:[#allocation8 + $0x60] sm:$0xff]
    %v1887 = vld [vmem:[#allocation8 + $0x68] sm:$0xff]
    %v1888 = vld [vmem:[#allocation8 + $0x70] sm:$0xff]
    %v1889 = vld [vmem:[#allocation8 + $0x78] sm:$0xff]
    %v1890 = vld [vmem:[%s5] sm:$0x1]
    %v1892 = vlaneseq
    %v1893 = vshrl.u32 %v1892, 7
    %v1894 = vsub.s32 0, %v1893
    %v1895 = vrot.slane %v1890, %v1894
    %v1898 = vrot.slane %v1873, 6
    %1900 = vmatprep.subr.mxu0 0.0
    %1901 = vmatpush1.msra.mxu0 %v1874
    %1902 = vmatprep.subr.mxu0 0.0
    %1903 = vmatpush1.msra.mxu0 %v1875
    %1904 = vmatprep.subr.mxu0 0.0
    %1905 = vmatpush1.msra.mxu0 %v1876
    %1906 = vmatprep.subr.mxu0 0.0
    %1907 = vmatpush1.msra.mxu0 %v1877
    %1908 = vmatprep.subr.mxu0 0.0
    %1909 = vmatpush1.msra.mxu0 %v1878
    %1910 = vmatprep.subr.mxu0 0.0
    %1911 = vmatpush1.msra.mxu0 %v1879
    %1912 = vmatprep.subr.mxu0 0.0
    %1913 = vmatpush1.msra.mxu0 %v1880
    %1914 = vmatprep.subr.mxu0 0.0
    %1915 = vmatpush1.msra.mxu0 %v1881
    %1916 = vmatprep.subr.mxu0 0.0
    %1917 = vmatpush1.msra.mxu0 %v1882
    %1918 = vmatprep.subr.mxu0 0.0
    %1919 = vmatpush1.msra.mxu0 %v1883
    %1920 = vmatprep.subr.mxu0 0.0
    %1921 = vmatpush1.msra.mxu0 %v1884
    %1922 = vmatprep.subr.mxu0 0.0
    %1923 = vmatpush1.msra.mxu0 %v1885
    %1924 = vmatprep.subr.mxu0 0.0
    %1925 = vmatpush1.msra.mxu0 %v1886
    %1926 = vmatprep.subr.mxu0 0.0
    %1927 = vmatpush1.msra.mxu0 %v1887
    %1928 = vmatprep.subr.mxu0 0.0
    %1929 = vmatpush1.msra.mxu0 %v1888
    %1930 = vmatprep.subr.mxu0 0.0
    %1931 = vmatpush1.msra.mxu0 %v1889
    %1932 = vmatprep.subr.mxu0 0.0
    %1933 = vmatpush1.msra.mxu0 0.0
    %1934 = vmatprep.subr.mxu0 0.0
    %1935 = vmatpush1.msra.mxu0 0.0
    %1936 = vmatprep.subr.mxu0 0.0
    %1937 = vmatpush1.msra.mxu0 0.0
    %1938 = vmatprep.subr.mxu0 0.0
    %1939 = vmatpush1.msra.mxu0 0.0
    %1940 = vmatprep.subr.mxu0 0.0
    %1941 = vmatpush1.msra.mxu0 0.0
    %1942 = vmatprep.subr.mxu0 0.0
    %1943 = vmatpush1.msra.mxu0 0.0
    %1944 = vmatprep.subr.mxu0 0.0
    %1945 = vmatpush1.msra.mxu0 0.0
    %1946 = vmatprep.subr.mxu0 0.0
    %1947 = vmatpush1.msra.mxu0 0.0
    %1948 = vmatprep.subr.mxu0 0.0
    %1949 = vmatpush1.msra.mxu0 0.0
    %1950 = vmatprep.subr.mxu0 0.0
    %1951 = vmatpush1.msra.mxu0 0.0
    %1952 = vmatprep.subr.mxu0 0.0
    %1953 = vmatpush1.msra.mxu0 0.0
    %1954 = vmatprep.subr.mxu0 0.0
    %1955 = vmatpush1.msra.mxu0 0.0
    %1956 = vmatprep.subr.mxu0 0.0
    %1957 = vmatpush1.msra.mxu0 0.0
    %1958 = vmatprep.subr.mxu0 0.0
    %1959 = vmatpush1.msra.mxu0 0.0
    %1960 = vmatprep.subr.mxu0 0.0
    %1961 = vmatpush1.msra.mxu0 0.0
    %1962 = vmatprep.subr.mxu0 0.0
    %1963 = vmatpush1.msra.mxu0 0.0
    %1964 = vmatprep.mubr.f32.mxu0 0.0
    %1965 = vmatmul.mubr.f32.gmra.mrb[0].mxu0 %v1898
    %v1966 = vpop.f32.mrb[0].mxu0
    %v1967 = vadd.f32 %v1895, %v1966
    %v1968 = vpop.f32.mrb[0].mxu0
    %1969 = vdwg.mxu0
    %1970 = vst [vmem:[#allocation10] sm:$0x3] %v1967
    // Predicated region
    $region42: #{tpu_custom_call.1} parent=1 // pred_check
      _
    $region43: #{tpu_custom_call.1} parent=1 // pred_check_branch
      %1972 = sbr.rel (0) target = $region45
    $region44: #{tpu_custom_call.1} parent=1 // pred_region
      %s1974 = ssub.s32 32, 32
      %1975 = vsyncadd [#allocation4], %s1974
      %s1977 = sshll.u32 [#allocation10], 4
      %s1978 = int_to_ptr.vmem [resolvable:$true] %s1977
      %1980 = dma.vmem_to_hbm [thread:$0]  %s1978, 32, %s6, [#allocation4]
    $region45: #{tpu_custom_call.1} parent=1 // pred_fallthru
      _
    // Predicated region
    $region46: #{tpu_custom_call.1} parent=1 // pred_check
      _
    $region47: #{tpu_custom_call.1} parent=1 // pred_check_branch
      %1982 = sbr.rel (0) target = $region49
    $region48: #{tpu_custom_call.1} parent=1 // pred_region
      %1983 = dma.done [#allocation4], 32
    $region49: #{tpu_custom_call.1} parent=1 // pred_fallthru
      _
    %1984 = vsyncpa [#allocation3], 1
    %1985 = vsyncpa [#allocation6], 1
    %1986 = vsyncpa [#allocation9], 1
    %1987 = vsyncpa [#allocation4], 1

</llo_original>
